<compile_context>
chip_gen: v7x
topology: tpu7x:2x2x1
jax: 0.10.0
libtpu: 0.0.40
codegen_flags: <defaults>
</compile_context>

<pallas_src>
import jax
import jax.numpy as jnp
from jax import lax
from jax.experimental import pallas as pl
from jax.experimental.pallas import tpu as pltpu


def _round_up(n, m):
    return ((n + m - 1) // m) * m


def _cdiv(a, b):
    return -(-a // b)


# ----------------------------------------------------------------------------- kernels
def _fused_mixer_fc_kernel(xi_ref, enc_ref,
                           g1_ref, be1_ref, w11_ref, bb11_ref, w12_ref, bb12_ref,
                           g2_ref, be2_ref, w21_ref, bb21_ref, w22_ref, bb22_ref,
                           fcw_ref, pu_ref, o_ref):
    """embed -> MixerBlock -> MixerBlock -> fc, fused; one (user, seq-tile) step.

    xi_ref : (1, TILE_S, 1) int32 location indices for this user / seq tile.
    enc_ref: (C, H) f32 encoder table (VMEM-resident, constant index_map).
    pu_ref : (1, 1, C) f32 = p_u @ fc_w[H:] + fc_b for this user.
    o_ref  : (1, TILE_S, C) f32 output slab (user-major layout).
    """
    C, H = enc_ref.shape
    inv_h = 1.0 / H

    # --- in-kernel embedding gather: exact one_hot(idx, C) @ encoder on MXU ---
    idx = xi_ref[0]                                        # (TILE_S, 1) int32
    tile_s = idx.shape[0]
    loc = lax.broadcasted_iota(jnp.int32, (tile_s, C), 1)  # (TILE_S, C)
    one_hot = (idx == loc).astype(jnp.float32)
    x = jnp.dot(one_hot, enc_ref[...],
                preferred_element_type=jnp.float32)        # (TILE_S, H) f32, exact

    def mixer_block(x, g_ref, b_ref, w1_ref, b1_ref, w2_ref, b2_ref):
        # LayerNorm (eps=1e-5, biased var), two-pass variance (f32).
        mu = jnp.sum(x, axis=-1, keepdims=True) * inv_h
        xc = x - mu
        var = jnp.sum(xc * xc, axis=-1, keepdims=True) * inv_h
        xn = xc * lax.rsqrt(var + 1e-5)
        xn = xn * g_ref[...] + b_ref[...]
        # MLP: bf16 MXU inputs, f32 accumulation.
        h = jnp.dot(xn.astype(jnp.bfloat16), w1_ref[...],
                    preferred_element_type=jnp.float32) + b1_ref[...]
        # tanh-approx GELU in f32 (v5e has no bf16 VALU/EUP).
        # TODO(synk): exact-erf GELU to match torch nn.GELU default.
        h = 0.5 * h * (1.0 + jnp.tanh(0.7978845608028654 *
                                      (h + 0.044715 * h * h * h)))
        y = jnp.dot(h.astype(jnp.bfloat16), w2_ref[...],
                    preferred_element_type=jnp.float32) + b2_ref[...]
        return x + y                                       # residual in f32

    h1 = mixer_block(x, g1_ref, be1_ref, w11_ref, bb11_ref, w12_ref, bb12_ref)
    h2 = mixer_block(h1, g2_ref, be2_ref, w21_ref, bb21_ref, w22_ref, bb22_ref)

    # fc: out_w @ fc_w[:H]  +  (p_u @ fc_w[H:] + b)  (per-user row, broadcast)
    out = jnp.dot(h2.astype(jnp.bfloat16), fcw_ref[...],
                  preferred_element_type=jnp.float32) + pu_ref[0]
    o_ref[0] = out


def _sdist_kernel(x_ref, o_ref):
    """Pairwise cosine similarity + causal (j<=i) exp-normalization, Ub users/step.

    x_ref: (Ub, Sp, C) f32.  o_ref: (Ub, Sp, Sp) f32.
    o[u, i, j] corresponds to the reference s_distance[i, j, u].
    """
    x = x_ref[...]                                         # (Ub, Sp, C)
    ub, sp, _ = x.shape
    # Batched Gram matrix on the MXU.
    dot = lax.dot_general(x, x, (((2,), (2,)), ((0,), (0,))),
                          preferred_element_type=jnp.float32)   # (Ub, Sp, Sp)
    i_idx = lax.broadcasted_iota(jnp.int32, (ub, sp, sp), 1)
    j_idx = lax.broadcasted_iota(jnp.int32, (ub, sp, sp), 2)
    eye = i_idx == j_idx
    diag = jnp.where(eye, dot, 0.0)                        # ||x_k||^2 on diagonal
    ni = jnp.maximum(jnp.sqrt(jnp.sum(diag, axis=2, keepdims=True)), 1e-8)  # (Ub,Sp,1)
    nj = jnp.maximum(jnp.sqrt(jnp.sum(diag, axis=1, keepdims=True)), 1e-8)  # (Ub,1,Sp)
    cos = dot / (ni * nj)                                  # exact division
    cos = jnp.where(cos > 0.0, cos, 0.0)                   # cos * (cos > 0)
    a = jnp.exp(cos) + 1e-10
    tri = j_idx <= i_idx
    # j > i entries keep their initial 1e-10; whole row i divided by causal sum.
    a_masked = jnp.where(tri, a, 1e-10)
    sum_w = jnp.sum(jnp.where(tri, a, 0.0), axis=2, keepdims=True)
    o_ref[...] = a_masked / sum_w


# ----------------------------------------------------------------------------- params
def init_params(key, *, input_size, user_count, hidden_size):
    """Raw (f32) parameters mirroring the torch module shapes."""
    ks = jax.random.split(key, 8)
    H = hidden_size

    def mixer_block(k):
        k1, k2 = jax.random.split(k)
        return {
            "gamma": jnp.ones((H,), jnp.float32),
            "beta": jnp.zeros((H,), jnp.float32),
            "w1": jax.random.normal(k1, (H, 2 * H), jnp.float32) * 0.02,
            "b1": jnp.zeros((2 * H,), jnp.float32),
            "w2": jax.random.normal(k2, (2 * H, H), jnp.float32) * 0.02,
            "b2": jnp.zeros((H,), jnp.float32),
        }

    return {
        "encoder": jax.random.normal(ks[0], (input_size, H), jnp.float32) * 0.02,
        "user_encoder": jax.random.normal(ks[1], (user_count, H), jnp.float32) * 0.02,
        "mlpmixer": mixer_block(ks[2]),
        "mlpmixer1": mixer_block(ks[3]),
        "fc_w": jax.random.normal(ks[4], (2 * H, input_size), jnp.float32) * 0.02,
        "fc_b": jnp.zeros((input_size,), jnp.float32),
    }


def pack_params(p):
    """One-time packing: 2-D rows for biases/LN params, bf16 MXU weights.

    No lane padding (H / 2H / C stay at true sizes; full-dim blocks are legal).
    """
    C, H = p["encoder"].shape

    def pack_block(b):
        return {
            "g": b["gamma"][None, :].astype(jnp.float32),      # (1, H)
            "be": b["beta"][None, :].astype(jnp.float32),      # (1, H)
            "w1": b["w1"].astype(jnp.bfloat16),                # (H, 2H)
            "b1": b["b1"][None, :].astype(jnp.float32),        # (1, 2H)
            "w2": b["w2"].astype(jnp.bfloat16),                # (2H, H)
            "b2": b["b2"][None, :].astype(jnp.float32),        # (1, H)
        }

    return {
        "encoder": p["encoder"].astype(jnp.float32),           # (C, H)
        "user_encoder": p["user_encoder"].astype(jnp.float32), # (users, H)
        "blk1": pack_block(p["mlpmixer"]),
        "blk2": pack_block(p["mlpmixer1"]),
        "fc_w_lo": p["fc_w"][:H].astype(jnp.bfloat16),         # (H, C) bf16 (in-kernel)
        "fc_w_hi": p["fc_w"][H:].astype(jnp.float32),          # (H, C) f32 (tiny, XLA)
        "fc_b": p["fc_b"].astype(jnp.float32),                 # (C,)
    }


# ----------------------------------------------------------------------------- forward
@jax.jit
def mlpmixer_forward(packed, x, t, active_user):
    """Mirrors MLPMixer.forward(x, ..., t, ..., active_user) (simplified args).

    x: (seq_len, user_len) int32 location indices.
    t: unused (MixerBlock definition not provided).
    active_user: (user_len,) int32 user indices.
    Returns (output, None, s_distance) like the reference.
    """
    del t
    S, U = x.shape
    enc = packed["encoder"]
    C, H = enc.shape

    # --- seq tiling: pad S to a multiple of 8 only (sublane); cap tile at 512 ---
    Sp = _round_up(S, 8)
    TILE_S = Sp if Sp <= 512 else 512
    Sp = _round_up(Sp, TILE_S)
    n_s = Sp // TILE_S

    # Indices, user-major, padded along S (padded rows gather encoder[0]; sliced off).
    xi = jnp.pad(x.T.astype(jnp.int32), ((0, 0), (0, Sp - S)))        # (U, Sp)
    xi = xi.reshape(U, Sp, 1)

    # p_u @ fc_w[H:] + fc_b computed ONCE per user (tiny), one row per grid-u.
    p_u = jnp.take(packed["user_encoder"], active_user, axis=0)       # (U, H)
    pu_fc = (p_u @ packed["fc_w_hi"] + packed["fc_b"][None, :]).reshape(U, 1, C)

    b1, b2 = packed["blk1"], packed["blk2"]
    weights = (enc,
               b1["g"], b1["be"], b1["w1"], b1["b1"], b1["w2"], b1["b2"],
               b2["g"], b2["be"], b2["w1"], b2["b1"], b2["w2"], b2["b2"],
               packed["fc_w_lo"])
    # All weights are 2-D and VMEM-resident (constant index_map).
    w_specs = [pl.BlockSpec(w.shape, lambda u, s: (0, 0)) for w in weights]

    # --- fused embed -> mixer -> mixer -> fc kernel, grid (user, seq-tile) ---
    out_usc = pl.pallas_call(
        _fused_mixer_fc_kernel,
        grid=(U, n_s),
        in_specs=[pl.BlockSpec((1, TILE_S, 1), lambda u, s: (u, s, 0))]
                 + w_specs
                 + [pl.BlockSpec((1, 1, C), lambda u, s: (u, 0, 0))],
        out_specs=pl.BlockSpec((1, TILE_S, C), lambda u, s: (u, s, 0)),
        out_shape=jax.ShapeDtypeStruct((U, Sp, C), jnp.float32),
        compiler_params=pltpu.CompilerParams(
            dimension_semantics=("parallel", "parallel")),
    )(xi, *weights, pu_fc)

    output = jnp.transpose(out_usc[:, :S, :], (1, 0, 2))              # (S, U, C)

    # --- s_distance: per-user pairwise cosine sim + causal normalization ---
    # Batch users per step; keep >=2 grid steps when possible (v7x megacore).
    Ub = min(8, _cdiv(U, 2)) if U >= 2 else 1
    n_u = _cdiv(U, Ub)
    Up = n_u * Ub
    sd_in = out_usc if Up == U else jnp.pad(out_usc, ((0, Up - U), (0, 0), (0, 0)))

    sd = pl.pallas_call(
        _sdist_kernel,
        grid=(n_u,),
        in_specs=[pl.BlockSpec((Ub, Sp, C), lambda u: (u, 0, 0))],
        out_specs=pl.BlockSpec((Ub, Sp, Sp), lambda u: (u, 0, 0)),
        out_shape=jax.ShapeDtypeStruct((Up, Sp, Sp), jnp.float32),
        compiler_params=pltpu.CompilerParams(
            dimension_semantics=("parallel",)),
    )(sd_in)
    s_distance = jnp.transpose(sd[:U, :S, :S], (1, 2, 0))             # (S, S, U)

    return output, None, s_distance


# ----------------------------------------------------------------------------- main
if __name__ == "__main__":
    seq_len, user_len = 8, 4
    input_size, user_count, hidden_size = 64, 16, 32

    key = jax.random.PRNGKey(0)
    kp, kx, ku, kt = jax.random.split(key, 4)

    raw_params = init_params(
        kp, input_size=input_size, user_count=user_count, hidden_size=hidden_size
    )
    packed = pack_params(raw_params)

    x = jax.random.randint(kx, (seq_len, user_len), 0, input_size, dtype=jnp.int32)
    active_user = jax.random.randint(ku, (user_len,), 0, user_count, dtype=jnp.int32)
    t = jax.random.uniform(kt, (seq_len, user_len), jnp.float32)      # unused

    output, _none, s_distance = mlpmixer_forward(packed, x, t, active_user)
    jax.block_until_ready((output, s_distance))

    assert output.shape == (seq_len, user_len, input_size)
    assert s_distance.shape == (seq_len, seq_len, user_len)
    assert bool(jnp.all(jnp.isfinite(output)))
    assert bool(jnp.all(jnp.isfinite(s_distance)))
    print("KERNEL_OK")
</pallas_src>

<mosaic_0001>
module attributes {stable_mosaic.version = 11 : i64} {
  func.func @_fused_mixer_fc_kernel(%arg0: i32, %arg1: i32, %arg2: memref<1x8x1xi32, #tpu.memory_space<vmem>>, %arg3: memref<64x32xf32, #tpu.memory_space<vmem>>, %arg4: memref<1x32xf32, #tpu.memory_space<vmem>>, %arg5: memref<1x32xf32, #tpu.memory_space<vmem>>, %arg6: memref<32x64xbf16, #tpu.memory_space<vmem>>, %arg7: memref<1x64xf32, #tpu.memory_space<vmem>>, %arg8: memref<64x32xbf16, #tpu.memory_space<vmem>>, %arg9: memref<1x32xf32, #tpu.memory_space<vmem>>, %arg10: memref<1x32xf32, #tpu.memory_space<vmem>>, %arg11: memref<1x32xf32, #tpu.memory_space<vmem>>, %arg12: memref<32x64xbf16, #tpu.memory_space<vmem>>, %arg13: memref<1x64xf32, #tpu.memory_space<vmem>>, %arg14: memref<64x32xbf16, #tpu.memory_space<vmem>>, %arg15: memref<1x32xf32, #tpu.memory_space<vmem>>, %arg16: memref<32x64xbf16, #tpu.memory_space<vmem>>, %arg17: memref<1x1x64xf32, #tpu.memory_space<vmem>>, %arg18: memref<1x8x64xf32, #tpu.memory_space<vmem>>) attributes {dimension_semantics = [#tpu.dimension_semantics<parallel>, #tpu.dimension_semantics<parallel>], iteration_bounds = array<i64: 4, 1>, scalar_prefetch = 0 : i64, scratch_operands = 0 : i64, tpu.core_type = #tpu.core_type<tc>, window_params = [{transform_indices = @transform_0, window_bounds = array<i64: 1, 8, 1>}, {pipeline_mode = #tpu.pipeline_mode<synchronous>, transform_indices = @transform_1, window_bounds = array<i64: 64, 32>}, {pipeline_mode = #tpu.pipeline_mode<synchronous>, transform_indices = @transform_2, window_bounds = array<i64: 1, 32>}, {pipeline_mode = #tpu.pipeline_mode<synchronous>, transform_indices = @transform_3, window_bounds = array<i64: 1, 32>}, {pipeline_mode = #tpu.pipeline_mode<synchronous>, transform_indices = @transform_4, window_bounds = array<i64: 32, 64>}, {pipeline_mode = #tpu.pipeline_mode<synchronous>, transform_indices = @transform_5, window_bounds = array<i64: 1, 64>}, {pipeline_mode = #tpu.pipeline_mode<synchronous>, transform_indices = @transform_6, window_bounds = array<i64: 64, 32>}, {pipeline_mode = #tpu.pipeline_mode<synchronous>, transform_indices = @transform_7, window_bounds = array<i64: 1, 32>}, {pipeline_mode = #tpu.pipeline_mode<synchronous>, transform_indices = @transform_8, window_bounds = array<i64: 1, 32>}, {pipeline_mode = #tpu.pipeline_mode<synchronous>, transform_indices = @transform_9, window_bounds = array<i64: 1, 32>}, {pipeline_mode = #tpu.pipeline_mode<synchronous>, transform_indices = @transform_10, window_bounds = array<i64: 32, 64>}, {pipeline_mode = #tpu.pipeline_mode<synchronous>, transform_indices = @transform_11, window_bounds = array<i64: 1, 64>}, {pipeline_mode = #tpu.pipeline_mode<synchronous>, transform_indices = @transform_12, window_bounds = array<i64: 64, 32>}, {pipeline_mode = #tpu.pipeline_mode<synchronous>, transform_indices = @transform_13, window_bounds = array<i64: 1, 32>}, {pipeline_mode = #tpu.pipeline_mode<synchronous>, transform_indices = @transform_14, window_bounds = array<i64: 32, 64>}, {transform_indices = @transform_15, window_bounds = array<i64: 1, 1, 64>}, {transform_indices = @transform_16, window_bounds = array<i64: 1, 8, 64>}]} {
    %c0 = arith.constant 0 : index
    %c0_0 = arith.constant 0 : index
    %c0_1 = arith.constant 0 : index
    %0 = vector.load %arg2[%c0, %c0_0, %c0_1] : memref<1x8x1xi32, #tpu.memory_space<vmem>>, vector<1x8x1xi32>
    %1 = vector.shape_cast %0 : vector<1x8x1xi32> to vector<8x1xi32>
    %2 = tpu.iota {dimensions = array<i32: 1>} : vector<8x64xi32>
    %3 = vector.broadcast %1 : vector<8x1xi32> to vector<8x64xi32>
    %4 = arith.cmpi eq, %3, %2 : vector<8x64xi32>
    %5 = arith.extui %4 : vector<8x64xi1> to vector<8x64xi32>
    %6 = arith.sitofp %5 : vector<8x64xi32> to vector<8x64xf32>
    %c0_2 = arith.constant 0 : index
    %c0_3 = arith.constant 0 : index
    %7 = vector.load %arg3[%c0_2, %c0_3] : memref<64x32xf32, #tpu.memory_space<vmem>>, vector<64x32xf32>
    %cst = arith.constant dense<0.000000e+00> : vector<8x32xf32>
    %8 = tpu.matmul %6, %7, %cst {dimension_numbers = #tpu.dot_dimension_numbers<[1], [0], [0], [1], [0, 0, 1, 1], [], []>} : vector<8x64xf32>, vector<64x32xf32>, vector<8x32xf32> -> vector<8x32xf32>
    %cst_4 = arith.constant dense<0.000000e+00> : vector<8xf32>
    %9 = vector.multi_reduction <add>, %8, %cst_4 [1] : vector<8x32xf32> to vector<8xf32>
    %10 = vector.shape_cast %9 : vector<8xf32> to vector<8x1xf32>
    %cst_5 = arith.constant 3.125000e-02 : f32
    %11 = vector.broadcast %cst_5 : f32 to vector<8x1xf32>
    %12 = arith.mulf %10, %11 : vector<8x1xf32>
    %13 = vector.broadcast %12 : vector<8x1xf32> to vector<8x32xf32>
    %14 = arith.subf %8, %13 : vector<8x32xf32>
    %15 = arith.mulf %14, %14 : vector<8x32xf32>
    %cst_6 = arith.constant dense<0.000000e+00> : vector<8xf32>
    %16 = vector.multi_reduction <add>, %15, %cst_6 [1] : vector<8x32xf32> to vector<8xf32>
    %17 = vector.shape_cast %16 : vector<8xf32> to vector<8x1xf32>
    %cst_7 = arith.constant 3.125000e-02 : f32
    %18 = vector.broadcast %cst_7 : f32 to vector<8x1xf32>
    %19 = arith.mulf %17, %18 : vector<8x1xf32>
    %cst_8 = arith.constant 9.99999974E-6 : f32
    %20 = vector.broadcast %cst_8 : f32 to vector<8x1xf32>
    %21 = arith.addf %19, %20 : vector<8x1xf32>
    %22 = math.rsqrt %21 : vector<8x1xf32>
    %23 = vector.broadcast %22 : vector<8x1xf32> to vector<8x32xf32>
    %24 = arith.mulf %14, %23 : vector<8x32xf32>
    %c0_9 = arith.constant 0 : index
    %c0_10 = arith.constant 0 : index
    %25 = vector.load %arg4[%c0_9, %c0_10] : memref<1x32xf32, #tpu.memory_space<vmem>>, vector<1x32xf32>
    %26 = vector.broadcast %25 : vector<1x32xf32> to vector<8x32xf32>
    %27 = arith.mulf %24, %26 : vector<8x32xf32>
    %c0_11 = arith.constant 0 : index
    %c0_12 = arith.constant 0 : index
    %28 = vector.load %arg5[%c0_11, %c0_12] : memref<1x32xf32, #tpu.memory_space<vmem>>, vector<1x32xf32>
    %29 = vector.broadcast %28 : vector<1x32xf32> to vector<8x32xf32>
    %30 = arith.addf %27, %29 : vector<8x32xf32>
    %31 = arith.truncf %30 : vector<8x32xf32> to vector<8x32xbf16>
    %c0_13 = arith.constant 0 : index
    %c0_14 = arith.constant 0 : index
    %32 = vector.load %arg6[%c0_13, %c0_14] : memref<32x64xbf16, #tpu.memory_space<vmem>>, vector<32x64xbf16>
    %cst_15 = arith.constant dense<0.000000e+00> : vector<8x64xf32>
    %33 = tpu.matmul %31, %32, %cst_15 {dimension_numbers = #tpu.dot_dimension_numbers<[1], [0], [0], [1], [0, 0, 1, 1], [], []>} : vector<8x32xbf16>, vector<32x64xbf16>, vector<8x64xf32> -> vector<8x64xf32>
    %c0_16 = arith.constant 0 : index
    %c0_17 = arith.constant 0 : index
    %34 = vector.load %arg7[%c0_16, %c0_17] : memref<1x64xf32, #tpu.memory_space<vmem>>, vector<1x64xf32>
    %35 = vector.broadcast %34 : vector<1x64xf32> to vector<8x64xf32>
    %36 = arith.addf %33, %35 : vector<8x64xf32>
    %cst_18 = arith.constant 5.000000e-01 : f32
    %37 = vector.broadcast %cst_18 : f32 to vector<8x64xf32>
    %38 = arith.mulf %37, %36 : vector<8x64xf32>
    %cst_19 = arith.constant 4.471500e-02 : f32
    %39 = vector.broadcast %cst_19 : f32 to vector<8x64xf32>
    %40 = arith.mulf %39, %36 : vector<8x64xf32>
    %41 = arith.mulf %40, %36 : vector<8x64xf32>
    %42 = arith.mulf %41, %36 : vector<8x64xf32>
    %43 = arith.addf %36, %42 : vector<8x64xf32>
    %cst_20 = arith.constant 0.797884583 : f32
    %44 = vector.broadcast %cst_20 : f32 to vector<8x64xf32>
    %45 = arith.mulf %44, %43 : vector<8x64xf32>
    %46 = math.tanh %45 : vector<8x64xf32>
    %cst_21 = arith.constant 1.000000e+00 : f32
    %47 = vector.broadcast %cst_21 : f32 to vector<8x64xf32>
    %48 = arith.addf %47, %46 : vector<8x64xf32>
    %49 = arith.mulf %38, %48 : vector<8x64xf32>
    %50 = arith.truncf %49 : vector<8x64xf32> to vector<8x64xbf16>
    %c0_22 = arith.constant 0 : index
    %c0_23 = arith.constant 0 : index
    %51 = vector.load %arg8[%c0_22, %c0_23] : memref<64x32xbf16, #tpu.memory_space<vmem>>, vector<64x32xbf16>
    %cst_24 = arith.constant dense<0.000000e+00> : vector<8x32xf32>
    %52 = tpu.matmul %50, %51, %cst_24 {dimension_numbers = #tpu.dot_dimension_numbers<[1], [0], [0], [1], [0, 0, 1, 1], [], []>} : vector<8x64xbf16>, vector<64x32xbf16>, vector<8x32xf32> -> vector<8x32xf32>
    %c0_25 = arith.constant 0 : index
    %c0_26 = arith.constant 0 : index
    %53 = vector.load %arg9[%c0_25, %c0_26] : memref<1x32xf32, #tpu.memory_space<vmem>>, vector<1x32xf32>
    %54 = vector.broadcast %53 : vector<1x32xf32> to vector<8x32xf32>
    %55 = arith.addf %52, %54 : vector<8x32xf32>
    %56 = arith.addf %8, %55 : vector<8x32xf32>
    %cst_27 = arith.constant dense<0.000000e+00> : vector<8xf32>
    %57 = vector.multi_reduction <add>, %56, %cst_27 [1] : vector<8x32xf32> to vector<8xf32>
    %58 = vector.shape_cast %57 : vector<8xf32> to vector<8x1xf32>
    %cst_28 = arith.constant 3.125000e-02 : f32
    %59 = vector.broadcast %cst_28 : f32 to vector<8x1xf32>
    %60 = arith.mulf %58, %59 : vector<8x1xf32>
    %61 = vector.broadcast %60 : vector<8x1xf32> to vector<8x32xf32>
    %62 = arith.subf %56, %61 : vector<8x32xf32>
    %63 = arith.mulf %62, %62 : vector<8x32xf32>
    %cst_29 = arith.constant dense<0.000000e+00> : vector<8xf32>
    %64 = vector.multi_reduction <add>, %63, %cst_29 [1] : vector<8x32xf32> to vector<8xf32>
    %65 = vector.shape_cast %64 : vector<8xf32> to vector<8x1xf32>
    %cst_30 = arith.constant 3.125000e-02 : f32
    %66 = vector.broadcast %cst_30 : f32 to vector<8x1xf32>
    %67 = arith.mulf %65, %66 : vector<8x1xf32>
    %cst_31 = arith.constant 9.99999974E-6 : f32
    %68 = vector.broadcast %cst_31 : f32 to vector<8x1xf32>
    %69 = arith.addf %67, %68 : vector<8x1xf32>
    %70 = math.rsqrt %69 : vector<8x1xf32>
    %71 = vector.broadcast %70 : vector<8x1xf32> to vector<8x32xf32>
    %72 = arith.mulf %62, %71 : vector<8x32xf32>
    %c0_32 = arith.constant 0 : index
    %c0_33 = arith.constant 0 : index
    %73 = vector.load %arg10[%c0_32, %c0_33] : memref<1x32xf32, #tpu.memory_space<vmem>>, vector<1x32xf32>
    %74 = vector.broadcast %73 : vector<1x32xf32> to vector<8x32xf32>
    %75 = arith.mulf %72, %74 : vector<8x32xf32>
    %c0_34 = arith.constant 0 : index
    %c0_35 = arith.constant 0 : index
    %76 = vector.load %arg11[%c0_34, %c0_35] : memref<1x32xf32, #tpu.memory_space<vmem>>, vector<1x32xf32>
    %77 = vector.broadcast %76 : vector<1x32xf32> to vector<8x32xf32>
    %78 = arith.addf %75, %77 : vector<8x32xf32>
    %79 = arith.truncf %78 : vector<8x32xf32> to vector<8x32xbf16>
    %c0_36 = arith.constant 0 : index
    %c0_37 = arith.constant 0 : index
    %80 = vector.load %arg12[%c0_36, %c0_37] : memref<32x64xbf16, #tpu.memory_space<vmem>>, vector<32x64xbf16>
    %cst_38 = arith.constant dense<0.000000e+00> : vector<8x64xf32>
    %81 = tpu.matmul %79, %80, %cst_38 {dimension_numbers = #tpu.dot_dimension_numbers<[1], [0], [0], [1], [0, 0, 1, 1], [], []>} : vector<8x32xbf16>, vector<32x64xbf16>, vector<8x64xf32> -> vector<8x64xf32>
    %c0_39 = arith.constant 0 : index
    %c0_40 = arith.constant 0 : index
    %82 = vector.load %arg13[%c0_39, %c0_40] : memref<1x64xf32, #tpu.memory_space<vmem>>, vector<1x64xf32>
    %83 = vector.broadcast %82 : vector<1x64xf32> to vector<8x64xf32>
    %84 = arith.addf %81, %83 : vector<8x64xf32>
    %cst_41 = arith.constant 5.000000e-01 : f32
    %85 = vector.broadcast %cst_41 : f32 to vector<8x64xf32>
    %86 = arith.mulf %85, %84 : vector<8x64xf32>
    %cst_42 = arith.constant 4.471500e-02 : f32
    %87 = vector.broadcast %cst_42 : f32 to vector<8x64xf32>
    %88 = arith.mulf %87, %84 : vector<8x64xf32>
    %89 = arith.mulf %88, %84 : vector<8x64xf32>
    %90 = arith.mulf %89, %84 : vector<8x64xf32>
    %91 = arith.addf %84, %90 : vector<8x64xf32>
    %cst_43 = arith.constant 0.797884583 : f32
    %92 = vector.broadcast %cst_43 : f32 to vector<8x64xf32>
    %93 = arith.mulf %92, %91 : vector<8x64xf32>
    %94 = math.tanh %93 : vector<8x64xf32>
    %cst_44 = arith.constant 1.000000e+00 : f32
    %95 = vector.broadcast %cst_44 : f32 to vector<8x64xf32>
    %96 = arith.addf %95, %94 : vector<8x64xf32>
    %97 = arith.mulf %86, %96 : vector<8x64xf32>
    %98 = arith.truncf %97 : vector<8x64xf32> to vector<8x64xbf16>
    %c0_45 = arith.constant 0 : index
    %c0_46 = arith.constant 0 : index
    %99 = vector.load %arg14[%c0_45, %c0_46] : memref<64x32xbf16, #tpu.memory_space<vmem>>, vector<64x32xbf16>
    %cst_47 = arith.constant dense<0.000000e+00> : vector<8x32xf32>
    %100 = tpu.matmul %98, %99, %cst_47 {dimension_numbers = #tpu.dot_dimension_numbers<[1], [0], [0], [1], [0, 0, 1, 1], [], []>} : vector<8x64xbf16>, vector<64x32xbf16>, vector<8x32xf32> -> vector<8x32xf32>
    %c0_48 = arith.constant 0 : index
    %c0_49 = arith.constant 0 : index
    %101 = vector.load %arg15[%c0_48, %c0_49] : memref<1x32xf32, #tpu.memory_space<vmem>>, vector<1x32xf32>
    %102 = vector.broadcast %101 : vector<1x32xf32> to vector<8x32xf32>
    %103 = arith.addf %100, %102 : vector<8x32xf32>
    %104 = arith.addf %56, %103 : vector<8x32xf32>
    %105 = arith.truncf %104 : vector<8x32xf32> to vector<8x32xbf16>
    %c0_50 = arith.constant 0 : index
    %c0_51 = arith.constant 0 : index
    %106 = vector.load %arg16[%c0_50, %c0_51] : memref<32x64xbf16, #tpu.memory_space<vmem>>, vector<32x64xbf16>
    %cst_52 = arith.constant dense<0.000000e+00> : vector<8x64xf32>
    %107 = tpu.matmul %105, %106, %cst_52 {dimension_numbers = #tpu.dot_dimension_numbers<[1], [0], [0], [1], [0, 0, 1, 1], [], []>} : vector<8x32xbf16>, vector<32x64xbf16>, vector<8x64xf32> -> vector<8x64xf32>
    %c0_53 = arith.constant 0 : index
    %c0_54 = arith.constant 0 : index
    %c0_55 = arith.constant 0 : index
    %108 = vector.load %arg17[%c0_53, %c0_54, %c0_55] : memref<1x1x64xf32, #tpu.memory_space<vmem>>, vector<1x1x64xf32>
    %109 = vector.shape_cast %108 : vector<1x1x64xf32> to vector<1x64xf32>
    %110 = vector.broadcast %109 : vector<1x64xf32> to vector<8x64xf32>
    %111 = arith.addf %107, %110 : vector<8x64xf32>
    %c0_56 = arith.constant 0 : index
    %c0_57 = arith.constant 0 : index
    %c0_58 = arith.constant 0 : index
    %112 = vector.load %arg18[%c0_56, %c0_57, %c0_58] : memref<1x8x64xf32, #tpu.memory_space<vmem>>, vector<1x8x64xf32>
    %113 = vector.shape_cast %112 : vector<1x8x64xf32> to vector<8x64xf32>
    %114 = vector.shape_cast %111 : vector<8x64xf32> to vector<1x8x64xf32>
    tpu.vector_store %arg18[%c0_56, %c0_57, %c0_58], %114 {strides = array<i32>} : memref<1x8x64xf32, #tpu.memory_space<vmem>>, vector<1x8x64xf32>,
    return
  }
  func.func @transform_0(%arg0: i32, %arg1: i32) -> (i32, i32, i32) {
    %c0_i32 = arith.constant 0 : i32
    %c0_i32_0 = arith.constant 0 : i32
    return %arg0, %arg1, %c0_i32 : i32, i32, i32
  }
  func.func @transform_1(%arg0: i32, %arg1: i32) -> (i32, i32) {
    %c0_i32 = arith.constant 0 : i32
    %c0_i32_0 = arith.constant 0 : i32
    %c0_i32_1 = arith.constant 0 : i32
    return %c0_i32, %c0_i32_0 : i32, i32
  }
  func.func @transform_2(%arg0: i32, %arg1: i32) -> (i32, i32) {
    %c0_i32 = arith.constant 0 : i32
    %c0_i32_0 = arith.constant 0 : i32
    %c0_i32_1 = arith.constant 0 : i32
    return %c0_i32, %c0_i32_0 : i32, i32
  }
  func.func @transform_3(%arg0: i32, %arg1: i32) -> (i32, i32) {
    %c0_i32 = arith.constant 0 : i32
    %c0_i32_0 = arith.constant 0 : i32
    %c0_i32_1 = arith.constant 0 : i32
    return %c0_i32, %c0_i32_0 : i32, i32
  }
  func.func @transform_4(%arg0: i32, %arg1: i32) -> (i32, i32) {
    %c0_i32 = arith.constant 0 : i32
    %c0_i32_0 = arith.constant 0 : i32
    %c0_i32_1 = arith.constant 0 : i32
    return %c0_i32, %c0_i32_0 : i32, i32
  }
  func.func @transform_5(%arg0: i32, %arg1: i32) -> (i32, i32) {
    %c0_i32 = arith.constant 0 : i32
    %c0_i32_0 = arith.constant 0 : i32
    %c0_i32_1 = arith.constant 0 : i32
    return %c0_i32, %c0_i32_0 : i32, i32
  }
  func.func @transform_6(%arg0: i32, %arg1: i32) -> (i32, i32) {
    %c0_i32 = arith.constant 0 : i32
    %c0_i32_0 = arith.constant 0 : i32
    %c0_i32_1 = arith.constant 0 : i32
    return %c0_i32, %c0_i32_0 : i32, i32
  }
  func.func @transform_7(%arg0: i32, %arg1: i32) -> (i32, i32) {
    %c0_i32 = arith.constant 0 : i32
    %c0_i32_0 = arith.constant 0 : i32
    %c0_i32_1 = arith.constant 0 : i32
    return %c0_i32, %c0_i32_0 : i32, i32
  }
  func.func @transform_8(%arg0: i32, %arg1: i32) -> (i32, i32) {
    %c0_i32 = arith.constant 0 : i32
    %c0_i32_0 = arith.constant 0 : i32
    %c0_i32_1 = arith.constant 0 : i32
    return %c0_i32, %c0_i32_0 : i32, i32
  }
  func.func @transform_9(%arg0: i32, %arg1: i32) -> (i32, i32) {
    %c0_i32 = arith.constant 0 : i32
    %c0_i32_0 = arith.constant 0 : i32
    %c0_i32_1 = arith.constant 0 : i32
    return %c0_i32, %c0_i32_0 : i32, i32
  }
  func.func @transform_10(%arg0: i32, %arg1: i32) -> (i32, i32) {
    %c0_i32 = arith.constant 0 : i32
    %c0_i32_0 = arith.constant 0 : i32
    %c0_i32_1 = arith.constant 0 : i32
    return %c0_i32, %c0_i32_0 : i32, i32
  }
  func.func @transform_11(%arg0: i32, %arg1: i32) -> (i32, i32) {
    %c0_i32 = arith.constant 0 : i32
    %c0_i32_0 = arith.constant 0 : i32
    %c0_i32_1 = arith.constant 0 : i32
    return %c0_i32, %c0_i32_0 : i32, i32
  }
  func.func @transform_12(%arg0: i32, %arg1: i32) -> (i32, i32) {
    %c0_i32 = arith.constant 0 : i32
    %c0_i32_0 = arith.constant 0 : i32
    %c0_i32_1 = arith.constant 0 : i32
    return %c0_i32, %c0_i32_0 : i32, i32
  }
  func.func @transform_13(%arg0: i32, %arg1: i32) -> (i32, i32) {
    %c0_i32 = arith.constant 0 : i32
    %c0_i32_0 = arith.constant 0 : i32
    %c0_i32_1 = arith.constant 0 : i32
    return %c0_i32, %c0_i32_0 : i32, i32
  }
  func.func @transform_14(%arg0: i32, %arg1: i32) -> (i32, i32) {
    %c0_i32 = arith.constant 0 : i32
    %c0_i32_0 = arith.constant 0 : i32
    %c0_i32_1 = arith.constant 0 : i32
    return %c0_i32, %c0_i32_0 : i32, i32
  }
  func.func @transform_15(%arg0: i32, %arg1: i32) -> (i32, i32, i32) {
    %c0_i32 = arith.constant 0 : i32
    %c0_i32_0 = arith.constant 0 : i32
    %c0_i32_1 = arith.constant 0 : i32
    return %arg0, %c0_i32, %c0_i32_0 : i32, i32, i32
  }
  func.func @transform_16(%arg0: i32, %arg1: i32) -> (i32, i32, i32) {
    %c0_i32 = arith.constant 0 : i32
    %c0_i32_0 = arith.constant 0 : i32
    return %arg0, %arg1, %c0_i32 : i32, i32, i32
  }
}

module attributes {stable_mosaic.version = 11 : i64} {
  func.func @_sdist_kernel(%arg0: i32, %arg1: memref<2x8x64xf32, #tpu.memory_space<vmem>>, %arg2: memref<2x8x8xf32, #tpu.memory_space<vmem>>) attributes {dimension_semantics = [#tpu.dimension_semantics<parallel>], iteration_bounds = array<i64: 2>, scalar_prefetch = 0 : i64, scratch_operands = 0 : i64, tpu.core_type = #tpu.core_type<tc>, window_params = [{transform_indices = @transform_0, window_bounds = array<i64: 2, 8, 64>}, {transform_indices = @transform_1, window_bounds = array<i64: 2, 8, 8>}]} {
    %c0 = arith.constant 0 : index
    %c0_0 = arith.constant 0 : index
    %c0_1 = arith.constant 0 : index
    %0 = vector.load %arg1[%c0, %c0_0, %c0_1] : memref<2x8x64xf32, #tpu.memory_space<vmem>>, vector<2x8x64xf32>
    %cst = arith.constant dense<0.000000e+00> : vector<2x8x8xf32>
    %1 = tpu.matmul %0, %0, %cst {dimension_numbers = #tpu.dot_dimension_numbers<[2], [2], [1], [1], [0, 0, 0, 1, 1, 1], [0], [0]>} : vector<2x8x64xf32>, vector<2x8x64xf32>, vector<2x8x8xf32> -> vector<2x8x8xf32>
    %2 = tpu.iota {dimensions = array<i32: 1>} : vector<2x8x8xi32>
    %3 = tpu.iota {dimensions = array<i32: 2>} : vector<2x8x8xi32>
    %4 = arith.cmpi eq, %2, %3 : vector<2x8x8xi32>
    %cst_2 = arith.constant 0.000000e+00 : f32
    %5 = vector.broadcast %cst_2 : f32 to vector<2x8x8xf32>
    %6 = arith.select %4, %1, %5 : vector<2x8x8xi1>, vector<2x8x8xf32>
    %cst_3 = arith.constant dense<0.000000e+00> : vector<2x8xf32>
    %7 = vector.multi_reduction <add>, %6, %cst_3 [2] : vector<2x8x8xf32> to vector<2x8xf32>
    %8 = vector.shape_cast %7 : vector<2x8xf32> to vector<2x8x1xf32>
    %9 = math.sqrt %8 : vector<2x8x1xf32>
    %cst_4 = arith.constant 9.99999993E-9 : f32
    %10 = vector.broadcast %cst_4 : f32 to vector<2x8x1xf32>
    %11 = arith.maximumf %9, %10 : vector<2x8x1xf32>
    %cst_5 = arith.constant dense<0.000000e+00> : vector<2x8xf32>
    %12 = vector.multi_reduction <add>, %6, %cst_5 [1] : vector<2x8x8xf32> to vector<2x8xf32>
    %13 = vector.shape_cast %12 : vector<2x8xf32> to vector<2x1x8xf32>
    %14 = math.sqrt %13 : vector<2x1x8xf32>
    %cst_6 = arith.constant 9.99999993E-9 : f32
    %15 = vector.broadcast %cst_6 : f32 to vector<2x1x8xf32>
    %16 = arith.maximumf %14, %15 : vector<2x1x8xf32>
    %17 = vector.broadcast %11 : vector<2x8x1xf32> to vector<2x8x8xf32>
    %18 = vector.broadcast %16 : vector<2x1x8xf32> to vector<2x8x8xf32>
    %19 = arith.mulf %17, %18 : vector<2x8x8xf32>
    %20 = arith.divf %1, %19 : vector<2x8x8xf32>
    %cst_7 = arith.constant 0.000000e+00 : f32
    %21 = vector.broadcast %cst_7 : f32 to vector<2x8x8xf32>
    %22 = arith.cmpf ogt, %20, %21 : vector<2x8x8xf32>
    %cst_8 = arith.constant 0.000000e+00 : f32
    %23 = vector.broadcast %cst_8 : f32 to vector<2x8x8xf32>
    %24 = arith.select %22, %20, %23 : vector<2x8x8xi1>, vector<2x8x8xf32>
    %25 = math.exp %24 : vector<2x8x8xf32>
    %cst_9 = arith.constant 1.000000e-10 : f32
    %26 = vector.broadcast %cst_9 : f32 to vector<2x8x8xf32>
    %27 = arith.addf %25, %26 : vector<2x8x8xf32>
    %28 = arith.cmpi sle, %3, %2 : vector<2x8x8xi32>
    %cst_10 = arith.constant 1.000000e-10 : f32
    %29 = vector.broadcast %cst_10 : f32 to vector<2x8x8xf32>
    %30 = arith.select %28, %27, %29 : vector<2x8x8xi1>, vector<2x8x8xf32>
    %cst_11 = arith.constant 0.000000e+00 : f32
    %31 = vector.broadcast %cst_11 : f32 to vector<2x8x8xf32>
    %32 = arith.select %28, %27, %31 : vector<2x8x8xi1>, vector<2x8x8xf32>
    %cst_12 = arith.constant dense<0.000000e+00> : vector<2x8xf32>
    %33 = vector.multi_reduction <add>, %32, %cst_12 [2] : vector<2x8x8xf32> to vector<2x8xf32>
    %34 = vector.shape_cast %33 : vector<2x8xf32> to vector<2x8x1xf32>
    %35 = vector.broadcast %34 : vector<2x8x1xf32> to vector<2x8x8xf32>
    %36 = arith.divf %30, %35 : vector<2x8x8xf32>
    %c0_13 = arith.constant 0 : index
    %c0_14 = arith.constant 0 : index
    %c0_15 = arith.constant 0 : index
    %37 = vector.load %arg2[%c0_13, %c0_14, %c0_15] : memref<2x8x8xf32, #tpu.memory_space<vmem>>, vector<2x8x8xf32>
    tpu.vector_store %arg2[%c0_13, %c0_14, %c0_15], %36 {strides = array<i32>} : memref<2x8x8xf32, #tpu.memory_space<vmem>>, vector<2x8x8xf32>,
    return
  }
  func.func @transform_0(%arg0: i32) -> (i32, i32, i32) {
    %c0_i32 = arith.constant 0 : i32
    %c0_i32_0 = arith.constant 0 : i32
    %c0_i32_1 = arith.constant 0 : i32
    return %arg0, %c0_i32, %c0_i32_0 : i32, i32, i32
  }
  func.func @transform_1(%arg0: i32) -> (i32, i32, i32) {
    %c0_i32 = arith.constant 0 : i32
    %c0_i32_0 = arith.constant 0 : i32
    %c0_i32_1 = arith.constant 0 : i32
    return %arg0, %c0_i32, %c0_i32_0 : i32, i32, i32
  }
}

</mosaic_0001>

<llo_original>
// kernel: mlpmixer_forward.3
$region0: #{mlpmixer_forward.3}
  #allocation0 [shape = 'u32[]', space=smem, size = 0x4, offset = 0x4, fixed_abs, tag = 'smem constant byte address 0x4 - core index']
  #allocation1 [shape = 'u32[144,128]{1,0:T(1,128)}', space=vmem, size = 0x12000, scoped, tag = 'internal scratch']
  %s0 = inlined_call_operand.vmem [shape: f32[4,8,64], index: 0, kind: input, shape index: {}]
  %s1 = inlined_call_operand.vmem [shape: f32[4,8,8], index: 1, kind: output, shape index: {}]
  %s2 = sld [smem:[#allocation0]]
  $region37: #{mlpmixer_forward.3} parent=0
    _
  %s4 = ssub.s32 1, %s2
  %s5 = scalar_select 0, %s4, %s2
  loop: start=0, step=1, limit=4
  $region2: #{mlpmixer_forward.3} parent=0 // loop_pre_header
    _
  $region3: #{mlpmixer_forward.3} parent=0 // loop_header
    %s7 = sphi 0, %s11
    %p8 = scmp.ge.s32.totalorder %s7, 4
    %s17 = sphi 0, %s19
    %s20 = sphi 0, %s17
    %s21 = sphi 0, %s20
    %s37 = sphi 0, %s21
    %s43 = sphi 0, %s45
    %s46 = sphi 0, %s43
    %s47 = sphi 0, %s46
    %s63 = sphi 0, %s47
  $region4: #{mlpmixer_forward.3} parent=0 // loop_header_branch
    %10 = sbr.rel (%p8) target = $region8
  $region5: #{mlpmixer_forward.3} parent=0 // loop_body
    %s12 = ssub.s32 %s7, 1
    %s13 = ssub.s32 %s7, 2
    %s14 = sadd.s32 %s7, 1
    %s15 = ssub.s32 %s7, %s14
    %p16 = scmp.eq.s32.totalorder %s15, 0
    %s18 = sadd.s32 %s17, 1
    %s19 = scalar_select %p16, %s17, %s18
    %p22 = pneg %p16
    %p23 = scmp.eq.s32.totalorder %s7, 1
    %p24 = por %p22, %p23
    %p25 = scmp.ne.s32.totalorder %s17, %s20
    %p26 = scmp.eq.s32.totalorder %s7, 0
    %p27 = por %p25, %p26
    %p28 = scmp.ne.s32.totalorder %s17, %s20
    %p29 = scmp.eq.s32.totalorder %s12, 1
    %p30 = por %p28, %p29
    %p31 = scmp.ne.s32.totalorder %s20, %s21
    %p32 = scmp.eq.s32.totalorder %s12, 0
    %p33 = por %p31, %p32
    %p34 = scmp.ne.s32.totalorder %s20, %s21
    %p35 = scmp.eq.s32.totalorder %s13, 1
    %p36 = por %p34, %p35
    %p38 = scmp.ne.s32.totalorder %s21, %s37
    %p39 = scmp.eq.s32.totalorder %s13, 0
    %p40 = por %p38, %p39
    %s41 = ssub.s32 %s7, %s14
    %p42 = scmp.eq.s32.totalorder %s41, 0
    %s44 = sadd.s32 %s43, 1
    %s45 = scalar_select %p42, %s43, %s44
    %p48 = pneg %p42
    %p49 = scmp.eq.s32.totalorder %s7, 1
    %p50 = por %p48, %p49
    %p51 = scmp.ne.s32.totalorder %s43, %s46
    %p52 = scmp.eq.s32.totalorder %s7, 0
    %p53 = por %p51, %p52
    %p54 = scmp.ne.s32.totalorder %s43, %s46
    %p55 = scmp.eq.s32.totalorder %s12, 1
    %p56 = por %p54, %p55
    %p57 = scmp.ne.s32.totalorder %s46, %s47
    %p58 = scmp.eq.s32.totalorder %s12, 0
    %p59 = por %p57, %p58
    %p60 = scmp.ne.s32.totalorder %s46, %s47
    %p61 = scmp.eq.s32.totalorder %s13, 1
    %p62 = por %p60, %p61
    %p64 = scmp.ne.s32.totalorder %s47, %s63
    %p65 = scmp.eq.s32.totalorder %s13, 0
    %p66 = por %p64, %p65
    %p67 = scmp.le.s32.totalorder 1, %s7
    %p68 = scmp.lt.s32.totalorder %s7, 3
    %p69 = pnand %p67, %p68
    %p70 = pneg %p69
    // Predicated region
    $region9: #{mlpmixer_forward.3} parent=5 // pred_check
      _
    $region10: #{mlpmixer_forward.3} parent=5 // pred_check_branch
      %72 = sbr.rel (%p69) target = $region12
    $region11: #{mlpmixer_forward.3} parent=5 // pred_region
      %s73 = ssub.s32 %s7, 1
    $region12: #{mlpmixer_forward.3} parent=5 // pred_fallthru
      _
    %p74 = scmp.lt.s32.totalorder %s7, 2
    // Predicated region
    $region13: #{mlpmixer_forward.3} parent=5 // pred_check
      %p75 = pneg %p74
    $region14: #{mlpmixer_forward.3} parent=5 // pred_check_branch
      %77 = sbr.rel (%p75) target = $region16
    $region15: #{mlpmixer_forward.3} parent=5 // pred_region
      // Predicated region
      $region17: #{mlpmixer_forward.3} parent=15 // pred_check
        %p78 = pneg %p27
      $region18: #{mlpmixer_forward.3} parent=15 // pred_check_branch
        %80 = sbr.rel (%p78) target = $region20
      $region19: #{mlpmixer_forward.3} parent=15 // pred_region
        %s81 = smul.u32 2, %s7
        %p82 = scmp.lt.s32.totalorder %s81, 3
        %s83 = scalar_select %p82, %s81, 3
        %s84 = smul.addr %s83, 8
        %s85 = scalar_lea.vmem %s0, %s84
        %s86 = smul.u32 2, %s7
      $region20: #{mlpmixer_forward.3} parent=15 // pred_fallthru
        _
    $region16: #{mlpmixer_forward.3} parent=5 // pred_fallthru
      _
    %p87 = scmp.le.s32.totalorder 1, %s7
    %p88 = scmp.lt.s32.totalorder %s7, 3
    %p89 = pnand %p87, %p88
    %p90 = pneg %p89
    // Predicated region
    $region21: #{mlpmixer_forward.3} parent=5 // pred_check
      _
    $region22: #{mlpmixer_forward.3} parent=5 // pred_check_branch
      %92 = sbr.rel (%p89) target = $region24
    $region23: #{mlpmixer_forward.3} parent=5 // pred_region
      %s93 = ssub.s32 %s7, 1
      %s94 = smul.u32 2, %s12
      %p95 = scmp.lt.s32.totalorder %s94, 3
      %s96 = scalar_select %p95, %s94, 3
      %s97 = smul.addr %s96, 8
      %s98 = scalar_lea.vmem %s0, %s97
      %p99 = pneg %p33
      %p100 = pneg %p30
      %p101 = pneg %p59
      %p102 = pneg %p56
      %s103 = smul.u32 2, %s12
      %p104 = scmp.lt.s32.totalorder %s103, 3
      %s105 = scalar_select %p104, %s103, 3
      %s106 = smul.addr %s105, 8
      %s107 = scalar_lea.vmem %s1, %s106
      %s108 = smul.u32 2, %s12
      %p109 = scmp.lt.s32.totalorder %s108, 3
      %s110 = scalar_select %p109, %s108, 3
      %s111 = smul.addr %s110, 8
      %s112 = scalar_lea.vmem %s0, %s111
      %s113 = smul.u32 2, %s12
      %s114 = smul.u32 2, %s12
      %p115 = scmp.lt.s32.totalorder %s114, 3
      %s116 = scalar_select %p115, %s114, 3
      %s117 = smul.addr %s116, 8
      %s118 = scalar_lea.vmem %s1, %s117
      %s119 = smul.u32 2, %s12
      %v120 = vld [vmem:[%s112] sm:$0xff]
      %v121 = vld [vmem:[%s112 + $0x8] sm:$0xff]
      %vm122 = vcmask 523264
      %v124 = vsel %vm122, %v120, 0
      %126 = vmatprep.subr.mxu0 0.0
      %127 = vmatpush1.xpose.msra.mxu0 %v124
      %128 = vmatprep.subr.mxu0 0.0
      %129 = vmatpush1.xpose.msra.mxu0 0.0
      %130 = vmatprep.subr.mxu0 0.0
      %131 = vmatpush1.xpose.msra.mxu0 0.0
      %132 = vmatprep.subr.mxu0 0.0
      %133 = vmatpush1.xpose.msra.mxu0 0.0
      %134 = vmatprep.subr.mxu0 0.0
      %135 = vmatpush1.xpose.msra.mxu0 0.0
      %136 = vmatprep.subr.mxu0 0.0
      %137 = vmatpush1.xpose.msra.mxu0 0.0
      %138 = vmatprep.subr.mxu0 0.0
      %139 = vmatpush1.xpose.msra.mxu0 0.0
      %140 = vmatprep.subr.mxu0 0.0
      %141 = vmatpush1.xpose.msra.mxu0 0.0
      %142 = vmatprep.subr.mxu0 0.0
      %143 = vmatpush1.xpose.msra.mxu0 0.0
      %144 = vmatprep.subr.mxu0 0.0
      %145 = vmatpush1.xpose.msra.mxu0 0.0
      %146 = vmatprep.subr.mxu0 0.0
      %147 = vmatpush1.xpose.msra.mxu0 0.0
      %148 = vmatprep.subr.mxu0 0.0
      %149 = vmatpush1.xpose.msra.mxu0 0.0
      %150 = vmatprep.subr.mxu0 0.0
      %151 = vmatpush1.xpose.msra.mxu0 0.0
      %152 = vmatprep.subr.mxu0 0.0
      %153 = vmatpush1.xpose.msra.mxu0 0.0
      %154 = vmatprep.subr.mxu0 0.0
      %155 = vmatpush1.xpose.msra.mxu0 0.0
      %156 = vmatprep.subr.mxu0 0.0
      %157 = vmatpush1.xpose.msra.mxu0 0.0
      %158 = vmatprep.subr.mxu0 0.0
      %159 = vmatpush1.xpose.msra.mxu0 0.0
      %160 = vmatprep.subr.mxu0 0.0
      %161 = vmatpush1.xpose.msra.mxu0 0.0
      %162 = vmatprep.subr.mxu0 0.0
      %163 = vmatpush1.xpose.msra.mxu0 0.0
      %164 = vmatprep.subr.mxu0 0.0
      %165 = vmatpush1.xpose.msra.mxu0 0.0
      %166 = vmatprep.subr.mxu0 0.0
      %167 = vmatpush1.xpose.msra.mxu0 0.0
      %168 = vmatprep.subr.mxu0 0.0
      %169 = vmatpush1.xpose.msra.mxu0 0.0
      %170 = vmatprep.subr.mxu0 0.0
      %171 = vmatpush1.xpose.msra.mxu0 0.0
      %172 = vmatprep.subr.mxu0 0.0
      %173 = vmatpush1.xpose.msra.mxu0 0.0
      %174 = vmatprep.subr.mxu0 0.0
      %175 = vmatpush1.xpose.msra.mxu0 0.0
      %176 = vmatprep.subr.mxu0 0.0
      %177 = vmatpush1.xpose.msra.mxu0 0.0
      %178 = vmatprep.subr.mxu0 0.0
      %179 = vmatpush1.xpose.msra.mxu0 0.0
      %180 = vmatprep.subr.mxu0 0.0
      %181 = vmatpush1.xpose.msra.mxu0 0.0
      %182 = vmatprep.subr.mxu0 0.0
      %183 = vmatpush1.xpose.msra.mxu0 0.0
      %184 = vmatprep.subr.mxu0 0.0
      %185 = vmatpush1.xpose.msra.mxu0 0.0
      %186 = vmatprep.subr.mxu0 0.0
      %187 = vmatpush1.xpose.msra.mxu0 0.0
      %188 = vmatprep.subr.mxu0 0.0
      %189 = vmatpush1.xpose.msra.mxu0 0.0
      %190 = vmatprep.mubr.f32.mxu0 0.0
      %191 = vmatmul.mubr.f32.gmra.mrb[0].mxu0 %v124
      %v192 = vpop.f32.mrb[0].mxu0
      %v193 = vadd.f32 0.0, %v192
      %v194 = vpop.f32.mrb[0].mxu0
      %195 = vdwg.mxu0
      %v197 = vsel %vm122, %v121, 0
      %199 = vmatprep.subr.mxu0 0.0
      %200 = vmatpush1.xpose.msra.mxu0 %v197
      %201 = vmatprep.subr.mxu0 0.0
      %202 = vmatpush1.xpose.msra.mxu0 0.0
      %203 = vmatprep.subr.mxu0 0.0
      %204 = vmatpush1.xpose.msra.mxu0 0.0
      %205 = vmatprep.subr.mxu0 0.0
      %206 = vmatpush1.xpose.msra.mxu0 0.0
      %207 = vmatprep.subr.mxu0 0.0
      %208 = vmatpush1.xpose.msra.mxu0 0.0
      %209 = vmatprep.subr.mxu0 0.0
      %210 = vmatpush1.xpose.msra.mxu0 0.0
      %211 = vmatprep.subr.mxu0 0.0
      %212 = vmatpush1.xpose.msra.mxu0 0.0
      %213 = vmatprep.subr.mxu0 0.0
      %214 = vmatpush1.xpose.msra.mxu0 0.0
      %215 = vmatprep.subr.mxu0 0.0
      %216 = vmatpush1.xpose.msra.mxu0 0.0
      %217 = vmatprep.subr.mxu0 0.0
      %218 = vmatpush1.xpose.msra.mxu0 0.0
      %219 = vmatprep.subr.mxu0 0.0
      %220 = vmatpush1.xpose.msra.mxu0 0.0
      %221 = vmatprep.subr.mxu0 0.0
      %222 = vmatpush1.xpose.msra.mxu0 0.0
      %223 = vmatprep.subr.mxu0 0.0
      %224 = vmatpush1.xpose.msra.mxu0 0.0
      %225 = vmatprep.subr.mxu0 0.0
      %226 = vmatpush1.xpose.msra.mxu0 0.0
      %227 = vmatprep.subr.mxu0 0.0
      %228 = vmatpush1.xpose.msra.mxu0 0.0
      %229 = vmatprep.subr.mxu0 0.0
      %230 = vmatpush1.xpose.msra.mxu0 0.0
      %231 = vmatprep.subr.mxu0 0.0
      %232 = vmatpush1.xpose.msra.mxu0 0.0
      %233 = vmatprep.subr.mxu0 0.0
      %234 = vmatpush1.xpose.msra.mxu0 0.0
      %235 = vmatprep.subr.mxu0 0.0
      %236 = vmatpush1.xpose.msra.mxu0 0.0
      %237 = vmatprep.subr.mxu0 0.0
      %238 = vmatpush1.xpose.msra.mxu0 0.0
      %239 = vmatprep.subr.mxu0 0.0
      %240 = vmatpush1.xpose.msra.mxu0 0.0
      %241 = vmatprep.subr.mxu0 0.0
      %242 = vmatpush1.xpose.msra.mxu0 0.0
      %243 = vmatprep.subr.mxu0 0.0
      %244 = vmatpush1.xpose.msra.mxu0 0.0
      %245 = vmatprep.subr.mxu0 0.0
      %246 = vmatpush1.xpose.msra.mxu0 0.0
      %247 = vmatprep.subr.mxu0 0.0
      %248 = vmatpush1.xpose.msra.mxu0 0.0
      %249 = vmatprep.subr.mxu0 0.0
      %250 = vmatpush1.xpose.msra.mxu0 0.0
      %251 = vmatprep.subr.mxu0 0.0
      %252 = vmatpush1.xpose.msra.mxu0 0.0
      %253 = vmatprep.subr.mxu0 0.0
      %254 = vmatpush1.xpose.msra.mxu0 0.0
      %255 = vmatprep.subr.mxu0 0.0
      %256 = vmatpush1.xpose.msra.mxu0 0.0
      %257 = vmatprep.subr.mxu0 0.0
      %258 = vmatpush1.xpose.msra.mxu0 0.0
      %259 = vmatprep.subr.mxu0 0.0
      %260 = vmatpush1.xpose.msra.mxu0 0.0
      %261 = vmatprep.subr.mxu0 0.0
      %262 = vmatpush1.xpose.msra.mxu0 0.0
      %263 = vmatprep.mubr.f32.mxu0 0.0
      %264 = vmatmul.mubr.f32.gmra.mrb[0].mxu0 %v197
      %v265 = vpop.f32.mrb[0].mxu0
      %v266 = vadd.f32 0.0, %v265
      %v267 = vpop.f32.mrb[0].mxu0
      %268 = vdwg.mxu0
      %v269 = vlaneseq
      %v270 = vshrl.u32 %v269, 7
      %v271 = vlaneseq
      %v272 = vand.u32 %v271, 127
      %vm273 = vcmp.eq.s32.totalorder %v270, %v272
      %v274 = vsel %vm273, %v193, 0.0
      %v275 = vsel %vm273, %v266, 0.0
      %vm276 = vcmask 64512
      %v277 = vsel %vm276, %v274, 0.0
      %278 = vadd.xlane.f32.xlu0 %v277
      %v279 = vpop.xlane.xlu0 %278
      %v280 = vsel %vm276, %v275, 0.0
      %281 = vadd.xlane.f32.xlu0 %v280
      %v282 = vpop.xlane.xlu0 %281
      %v283 = vrsqrt.pop %v279
      %v284 = vmul.f32 %v279, %v283
      %vm285 = vcmp.eq.f32.partialorder %v279, inf
      %v286 = vsel %vm285, %v279, %v284
      %vm287 = vcmp.eq.f32.partialorder %v279, 0.0
      %v288 = vand.u32 %v279, 2147483648
      %v289 = vsel %vm287, %v288, %v286
      %v290 = vrsqrt.pop %v282
      %v291 = vmul.f32 %v282, %v290
      %vm292 = vcmp.eq.f32.partialorder %v282, inf
      %v293 = vsel %vm292, %v282, %v291
      %vm294 = vcmp.eq.f32.partialorder %v282, 0.0
      %v295 = vand.u32 %v282, 2147483648
      %v296 = vsel %vm294, %v295, %v293
      %v297 = vmax.f32 %v289, 1e-08
      %v298 = vmax.f32 %v296, 1e-08
      %v299 = vrot.slane %v277, 4
      %v300 = vadd.f32 %v277, %v299
      %v301 = vrot.slane %v300, 2
      %v302 = vadd.f32 %v300, %v301
      %v303 = vrot.slane %v302, 1
      %v304 = vadd.f32 %v302, %v303
      %v305 = vrot.slane %v280, 4
      %v306 = vadd.f32 %v280, %v305
      %v307 = vrot.slane %v306, 2
      %v308 = vadd.f32 %v306, %v307
      %v309 = vrot.slane %v308, 1
      %v310 = vadd.f32 %v308, %v309
      %v311 = vrsqrt.pop %v304
      %v312 = vmul.f32 %v304, %v311
      %vm313 = vcmp.eq.f32.partialorder %v304, inf
      %v314 = vsel %vm313, %v304, %v312
      %vm315 = vcmp.eq.f32.partialorder %v304, 0.0
      %v316 = vand.u32 %v304, 2147483648
      %v317 = vsel %vm315, %v316, %v314
      %v318 = vrsqrt.pop %v310
      %v319 = vmul.f32 %v310, %v318
      %vm320 = vcmp.eq.f32.partialorder %v310, inf
      %v321 = vsel %vm320, %v310, %v319
      %vm322 = vcmp.eq.f32.partialorder %v310, 0.0
      %v323 = vand.u32 %v310, 2147483648
      %v324 = vsel %vm322, %v323, %v321
      %v325 = vmax.f32 %v317, 1e-08
      %v326 = vmax.f32 %v324, 1e-08
      %v327 = vmul.f32 %v297, %v325
      %v328 = vmul.f32 %v298, %v326
      %v329 = vrcp.pop %v327
      %v330 = vmul.f32 %v193, %v329
      %v331 = vrcp.pop %v328
      %v332 = vmul.f32 %v266, %v331
      %vm333 = vcmp.gt.f32.partialorder %v330, 0.0
      %vm334 = vcmp.gt.f32.partialorder %v332, 0.0
      %v335 = vsel %vm333, %v330, 0.0
      %v336 = vsel %vm334, %v332, 0.0
      %v337 = vmul.f32 %v335, 1.442695
      %v338 = vpow.pop %v337
      %v339 = vmul.f32 %v336, 1.442695
      %v340 = vpow.pop %v339
      %v341 = vadd.f32 %v338, 1e-10
      %v342 = vadd.f32 %v340, 1e-10
      %vm343 = vcmp.le.s32.totalorder %v272, %v270
      %v344 = vsel %vm343, %v341, 1e-10
      %v345 = vsel %vm343, %v342, 1e-10
      %v346 = vsel %vm343, %v341, 0.0
      %v347 = vsel %vm343, %v342, 0.0
      %v348 = vsel %vm276, %v346, 0.0
      %349 = vadd.xlane.f32.xlu0 %v348
      %v350 = vpop.xlane.xlu0 %349
      %v351 = vsel %vm276, %v347, 0.0
      %352 = vadd.xlane.f32.xlu0 %v351
      %v353 = vpop.xlane.xlu0 %352
      %v354 = vrcp.pop %v350
      %v355 = vmul.f32 %v344, %v354
      %v356 = vrcp.pop %v353
      %v357 = vmul.f32 %v345, %v356
      %358 = vst.msk [vmem:[%s118] sm:$0xff] %vm276, %v355
      %359 = vst.msk [vmem:[%s118 + $0x8] sm:$0xff] %vm276, %v357
      %s360 = smul.u32 2, %s12
      %p361 = scmp.lt.s32.totalorder %s360, 3
      %s362 = scalar_select %p361, %s360, 3
      %s363 = smul.addr %s362, 8
      %s364 = scalar_lea.vmem %s1, %s363
      // Predicated region
      $region25: #{mlpmixer_forward.3} parent=23 // pred_check
        %p365 = pneg %p56
      $region26: #{mlpmixer_forward.3} parent=23 // pred_check_branch
        %367 = sbr.rel (%p365) target = $region28
      $region27: #{mlpmixer_forward.3} parent=23 // pred_region
        %s368 = smul.u32 2, %s12
      $region28: #{mlpmixer_forward.3} parent=23 // pred_fallthru
        _
    $region24: #{mlpmixer_forward.3} parent=5 // pred_fallthru
      _
    %p369 = scmp.le.s32.totalorder 2, %s7
    // Predicated region
    $region29: #{mlpmixer_forward.3} parent=5 // pred_check
      %p370 = pneg %p369
    $region30: #{mlpmixer_forward.3} parent=5 // pred_check_branch
      %372 = sbr.rel (%p370) target = $region32
    $region31: #{mlpmixer_forward.3} parent=5 // pred_region
      %s373 = ssub.s32 %s7, 2
      // Predicated region
      $region33: #{mlpmixer_forward.3} parent=31 // pred_check
        %p374 = pneg %p62
      $region34: #{mlpmixer_forward.3} parent=31 // pred_check_branch
        %376 = sbr.rel (%p374) target = $region36
      $region35: #{mlpmixer_forward.3} parent=31 // pred_region
        %s377 = smul.u32 2, %s13
        %p378 = scmp.lt.s32.totalorder %s377, 3
        %s379 = scalar_select %p378, %s377, 3
        %s380 = smul.addr %s379, 8
        %s381 = scalar_lea.vmem %s1, %s380
      $region36: #{mlpmixer_forward.3} parent=31 // pred_fallthru
        _
    $region32: #{mlpmixer_forward.3} parent=5 // pred_fallthru
      _
  $region6: #{mlpmixer_forward.3} parent=0 // loop_footer
    %s11 = sadd.s32 1, %s7
  $region7: #{mlpmixer_forward.3} parent=0 // loop_footer_branch
    %6 = sbr.rel target = $region3
  $region8: #{mlpmixer_forward.3} parent=0 // loop_exit
    _

// kernel: mlpmixer_forward.2
$region0: #{mlpmixer_forward.2}
  #allocation0 [shape = 'u32[]', space=smem, size = 0x4, offset = 0x4, fixed_abs, tag = 'smem constant byte address 0x4 - core index']
  #allocation1 [shape = 'u32[144,128]{1,0:T(1,128)}', space=vmem, size = 0x12000, scoped, tag = 'internal scratch']
  %s0 = inlined_call_operand.vmem [shape: s32[4,8,1], index: 0, kind: input, shape index: {}]
  %s1 = inlined_call_operand.vmem [shape: f32[64,32], index: 1, kind: input, shape index: {}]
  %s2 = inlined_call_operand.vmem [shape: f32[1,32], index: 2, kind: input, shape index: {}]
  %s3 = inlined_call_operand.vmem [shape: f32[1,32], index: 3, kind: input, shape index: {}]
  %s4 = inlined_call_operand.vmem [shape: bf16[32,64], index: 4, kind: input, shape index: {}]
  %s5 = inlined_call_operand.vmem [shape: f32[1,64], index: 5, kind: input, shape index: {}]
  %s6 = inlined_call_operand.vmem [shape: bf16[64,32], index: 6, kind: input, shape index: {}]
  %s7 = inlined_call_operand.vmem [shape: f32[1,32], index: 7, kind: input, shape index: {}]
  %s8 = inlined_call_operand.vmem [shape: f32[1,32], index: 8, kind: input, shape index: {}]
  %s9 = inlined_call_operand.vmem [shape: f32[1,32], index: 9, kind: input, shape index: {}]
  %s10 = inlined_call_operand.vmem [shape: bf16[32,64], index: 10, kind: input, shape index: {}]
  %s11 = inlined_call_operand.vmem [shape: f32[1,64], index: 11, kind: input, shape index: {}]
  %s12 = inlined_call_operand.vmem [shape: bf16[64,32], index: 12, kind: input, shape index: {}]
  %s13 = inlined_call_operand.vmem [shape: f32[1,32], index: 13, kind: input, shape index: {}]
  %s14 = inlined_call_operand.vmem [shape: bf16[32,64], index: 14, kind: input, shape index: {}]
  %s15 = inlined_call_operand.vmem [shape: f32[4,1,64], index: 15, kind: input, shape index: {}]
  %s16 = inlined_call_operand.vmem [shape: f32[4,8,64], index: 16, kind: output, shape index: {}]
  %s17 = sld [smem:[#allocation0]]
  $region97: #{mlpmixer_forward.2} parent=0
    _
  %s19 = ssub.s32 1, %s17
  %s20 = scalar_select 0, %s19, %s17
  loop: start=0, step=1, limit=6
  $region2: #{mlpmixer_forward.2} parent=0 // loop_pre_header
    _
  $region3: #{mlpmixer_forward.2} parent=0 // loop_header
    %s22 = sphi 0, %s26
    %p23 = scmp.ge.s32.totalorder %s22, 6
    %s29 = sphi 0, %s41
    %s30 = sphi 0, %s37
    %s31 = sphi 0, %s29
    %s32 = sphi 0, %s30
    %s33 = sphi 0, %s31
    %s34 = sphi 0, %s32
    %s46 = sphi 0, %s48
    %s49 = sphi 0, %s46
    %s50 = sphi 0, %s49
    %s66 = sphi 0, %s50
    %s70 = sphi 0, %s70
    %s72 = sphi 0, %s70
    %s73 = sphi 0, %s72
    %s87 = sphi 0, %s73
    %s91 = sphi 0, %s91
    %s93 = sphi 0, %s91
    %s94 = sphi 0, %s93
    %s108 = sphi 0, %s94
    %s112 = sphi 0, %s112
    %s114 = sphi 0, %s112
    %s115 = sphi 0, %s114
    %s129 = sphi 0, %s115
    %s133 = sphi 0, %s133
    %s135 = sphi 0, %s133
    %s136 = sphi 0, %s135
    %s150 = sphi 0, %s136
    %s154 = sphi 0, %s154
    %s156 = sphi 0, %s154
    %s157 = sphi 0, %s156
    %s171 = sphi 0, %s157
    %s175 = sphi 0, %s175
    %s177 = sphi 0, %s175
    %s178 = sphi 0, %s177
    %s192 = sphi 0, %s178
    %s196 = sphi 0, %s196
    %s198 = sphi 0, %s196
    %s199 = sphi 0, %s198
    %s213 = sphi 0, %s199
    %s217 = sphi 0, %s217
    %s219 = sphi 0, %s217
    %s220 = sphi 0, %s219
    %s234 = sphi 0, %s220
    %s238 = sphi 0, %s238
    %s240 = sphi 0, %s238
    %s241 = sphi 0, %s240
    %s255 = sphi 0, %s241
    %s259 = sphi 0, %s259
    %s261 = sphi 0, %s259
    %s262 = sphi 0, %s261
    %s276 = sphi 0, %s262
    %s280 = sphi 0, %s280
    %s282 = sphi 0, %s280
    %s283 = sphi 0, %s282
    %s297 = sphi 0, %s283
    %s301 = sphi 0, %s301
    %s303 = sphi 0, %s301
    %s304 = sphi 0, %s303
    %s318 = sphi 0, %s304
    %s322 = sphi 0, %s322
    %s324 = sphi 0, %s322
    %s325 = sphi 0, %s324
    %s339 = sphi 0, %s325
    %s343 = sphi 0, %s343
    %s345 = sphi 0, %s343
    %s346 = sphi 0, %s345
    %s360 = sphi 0, %s346
    %s366 = sphi 0, %s368
    %s369 = sphi 0, %s366
    %s370 = sphi 0, %s369
    %s386 = sphi 0, %s370
    %s394 = sphi 0, %s396
    %s397 = sphi 0, %s394
    %s398 = sphi 0, %s397
    %s414 = sphi 0, %s398
  $region4: #{mlpmixer_forward.2} parent=0 // loop_header_branch
    %25 = sbr.rel (%p23) target = $region8
  $region5: #{mlpmixer_forward.2} parent=0 // loop_body
    %s27 = ssub.s32 %s22, 1
    %s28 = ssub.s32 %s22, 2
    %s35 = sadd.s32 1, %s30
    %p36 = scmp.ge.s32.totalorder %s35, 1
    %s37 = scalar_select %p36, 0, %s35
    %s38 = sadd.s32 1, %s29
    %s39 = scalar_select %p36, %s38, %s29
    %p40 = scmp.ge.s32.totalorder %s39, 4
    %s41 = scalar_select %p40, 0, %s39
    %s42 = ssub.s32 %s29, %s41
    %s43 = ssub.s32 %s30, %s37
    %s44 = sor.u32 %s42, %s43
    %p45 = scmp.eq.s32.totalorder %s44, 0
    %s47 = sadd.s32 %s46, 1
    %s48 = scalar_select %p45, %s46, %s47
    %p51 = pneg %p45
    %p52 = scmp.eq.s32.totalorder %s22, 3
    %p53 = por %p51, %p52
    %p54 = scmp.ne.s32.totalorder %s46, %s49
    %p55 = scmp.eq.s32.totalorder %s22, 0
    %p56 = por %p54, %p55
    %p57 = scmp.ne.s32.totalorder %s46, %s49
    %p58 = scmp.eq.s32.totalorder %s27, 3
    %p59 = por %p57, %p58
    %p60 = scmp.ne.s32.totalorder %s49, %s50
    %p61 = scmp.eq.s32.totalorder %s27, 0
    %p62 = por %p60, %p61
    %p63 = scmp.ne.s32.totalorder %s49, %s50
    %p64 = scmp.eq.s32.totalorder %s28, 3
    %p65 = por %p63, %p64
    %p67 = scmp.ne.s32.totalorder %s50, %s66
    %p68 = scmp.eq.s32.totalorder %s28, 0
    %p69 = por %p67, %p68
    %s71 = sadd.s32 %s70, 1
    %p74 = scmp.eq.s32.totalorder %s22, 3
    %p75 = scmp.ne.s32.totalorder %s70, %s72
    %p76 = scmp.eq.s32.totalorder %s22, 0
    %p77 = por %p75, %p76
    %p78 = scmp.ne.s32.totalorder %s70, %s72
    %p79 = scmp.eq.s32.totalorder %s27, 3
    %p80 = por %p78, %p79
    %p81 = scmp.ne.s32.totalorder %s72, %s73
    %p82 = scmp.eq.s32.totalorder %s27, 0
    %p83 = por %p81, %p82
    %p84 = scmp.ne.s32.totalorder %s72, %s73
    %p85 = scmp.eq.s32.totalorder %s28, 3
    %p86 = por %p84, %p85
    %p88 = scmp.ne.s32.totalorder %s73, %s87
    %p89 = scmp.eq.s32.totalorder %s28, 0
    %p90 = por %p88, %p89
    %s92 = sadd.s32 %s91, 1
    %p95 = scmp.eq.s32.totalorder %s22, 3
    %p96 = scmp.ne.s32.totalorder %s91, %s93
    %p97 = scmp.eq.s32.totalorder %s22, 0
    %p98 = por %p96, %p97
    %p99 = scmp.ne.s32.totalorder %s91, %s93
    %p100 = scmp.eq.s32.totalorder %s27, 3
    %p101 = por %p99, %p100
    %p102 = scmp.ne.s32.totalorder %s93, %s94
    %p103 = scmp.eq.s32.totalorder %s27, 0
    %p104 = por %p102, %p103
    %p105 = scmp.ne.s32.totalorder %s93, %s94
    %p106 = scmp.eq.s32.totalorder %s28, 3
    %p107 = por %p105, %p106
    %p109 = scmp.ne.s32.totalorder %s94, %s108
    %p110 = scmp.eq.s32.totalorder %s28, 0
    %p111 = por %p109, %p110
    %s113 = sadd.s32 %s112, 1
    %p116 = scmp.eq.s32.totalorder %s22, 3
    %p117 = scmp.ne.s32.totalorder %s112, %s114
    %p118 = scmp.eq.s32.totalorder %s22, 0
    %p119 = por %p117, %p118
    %p120 = scmp.ne.s32.totalorder %s112, %s114
    %p121 = scmp.eq.s32.totalorder %s27, 3
    %p122 = por %p120, %p121
    %p123 = scmp.ne.s32.totalorder %s114, %s115
    %p124 = scmp.eq.s32.totalorder %s27, 0
    %p125 = por %p123, %p124
    %p126 = scmp.ne.s32.totalorder %s114, %s115
    %p127 = scmp.eq.s32.totalorder %s28, 3
    %p128 = por %p126, %p127
    %p130 = scmp.ne.s32.totalorder %s115, %s129
    %p131 = scmp.eq.s32.totalorder %s28, 0
    %p132 = por %p130, %p131
    %s134 = sadd.s32 %s133, 1
    %p137 = scmp.eq.s32.totalorder %s22, 3
    %p138 = scmp.ne.s32.totalorder %s133, %s135
    %p139 = scmp.eq.s32.totalorder %s22, 0
    %p140 = por %p138, %p139
    %p141 = scmp.ne.s32.totalorder %s133, %s135
    %p142 = scmp.eq.s32.totalorder %s27, 3
    %p143 = por %p141, %p142
    %p144 = scmp.ne.s32.totalorder %s135, %s136
    %p145 = scmp.eq.s32.totalorder %s27, 0
    %p146 = por %p144, %p145
    %p147 = scmp.ne.s32.totalorder %s135, %s136
    %p148 = scmp.eq.s32.totalorder %s28, 3
    %p149 = por %p147, %p148
    %p151 = scmp.ne.s32.totalorder %s136, %s150
    %p152 = scmp.eq.s32.totalorder %s28, 0
    %p153 = por %p151, %p152
    %s155 = sadd.s32 %s154, 1
    %p158 = scmp.eq.s32.totalorder %s22, 3
    %p159 = scmp.ne.s32.totalorder %s154, %s156
    %p160 = scmp.eq.s32.totalorder %s22, 0
    %p161 = por %p159, %p160
    %p162 = scmp.ne.s32.totalorder %s154, %s156
    %p163 = scmp.eq.s32.totalorder %s27, 3
    %p164 = por %p162, %p163
    %p165 = scmp.ne.s32.totalorder %s156, %s157
    %p166 = scmp.eq.s32.totalorder %s27, 0
    %p167 = por %p165, %p166
    %p168 = scmp.ne.s32.totalorder %s156, %s157
    %p169 = scmp.eq.s32.totalorder %s28, 3
    %p170 = por %p168, %p169
    %p172 = scmp.ne.s32.totalorder %s157, %s171
    %p173 = scmp.eq.s32.totalorder %s28, 0
    %p174 = por %p172, %p173
    %s176 = sadd.s32 %s175, 1
    %p179 = scmp.eq.s32.totalorder %s22, 3
    %p180 = scmp.ne.s32.totalorder %s175, %s177
    %p181 = scmp.eq.s32.totalorder %s22, 0
    %p182 = por %p180, %p181
    %p183 = scmp.ne.s32.totalorder %s175, %s177
    %p184 = scmp.eq.s32.totalorder %s27, 3
    %p185 = por %p183, %p184
    %p186 = scmp.ne.s32.totalorder %s177, %s178
    %p187 = scmp.eq.s32.totalorder %s27, 0
    %p188 = por %p186, %p187
    %p189 = scmp.ne.s32.totalorder %s177, %s178
    %p190 = scmp.eq.s32.totalorder %s28, 3
    %p191 = por %p189, %p190
    %p193 = scmp.ne.s32.totalorder %s178, %s192
    %p194 = scmp.eq.s32.totalorder %s28, 0
    %p195 = por %p193, %p194
    %s197 = sadd.s32 %s196, 1
    %p200 = scmp.eq.s32.totalorder %s22, 3
    %p201 = scmp.ne.s32.totalorder %s196, %s198
    %p202 = scmp.eq.s32.totalorder %s22, 0
    %p203 = por %p201, %p202
    %p204 = scmp.ne.s32.totalorder %s196, %s198
    %p205 = scmp.eq.s32.totalorder %s27, 3
    %p206 = por %p204, %p205
    %p207 = scmp.ne.s32.totalorder %s198, %s199
    %p208 = scmp.eq.s32.totalorder %s27, 0
    %p209 = por %p207, %p208
    %p210 = scmp.ne.s32.totalorder %s198, %s199
    %p211 = scmp.eq.s32.totalorder %s28, 3
    %p212 = por %p210, %p211
    %p214 = scmp.ne.s32.totalorder %s199, %s213
    %p215 = scmp.eq.s32.totalorder %s28, 0
    %p216 = por %p214, %p215
    %s218 = sadd.s32 %s217, 1
    %p221 = scmp.eq.s32.totalorder %s22, 3
    %p222 = scmp.ne.s32.totalorder %s217, %s219
    %p223 = scmp.eq.s32.totalorder %s22, 0
    %p224 = por %p222, %p223
    %p225 = scmp.ne.s32.totalorder %s217, %s219
    %p226 = scmp.eq.s32.totalorder %s27, 3
    %p227 = por %p225, %p226
    %p228 = scmp.ne.s32.totalorder %s219, %s220
    %p229 = scmp.eq.s32.totalorder %s27, 0
    %p230 = por %p228, %p229
    %p231 = scmp.ne.s32.totalorder %s219, %s220
    %p232 = scmp.eq.s32.totalorder %s28, 3
    %p233 = por %p231, %p232
    %p235 = scmp.ne.s32.totalorder %s220, %s234
    %p236 = scmp.eq.s32.totalorder %s28, 0
    %p237 = por %p235, %p236
    %s239 = sadd.s32 %s238, 1
    %p242 = scmp.eq.s32.totalorder %s22, 3
    %p243 = scmp.ne.s32.totalorder %s238, %s240
    %p244 = scmp.eq.s32.totalorder %s22, 0
    %p245 = por %p243, %p244
    %p246 = scmp.ne.s32.totalorder %s238, %s240
    %p247 = scmp.eq.s32.totalorder %s27, 3
    %p248 = por %p246, %p247
    %p249 = scmp.ne.s32.totalorder %s240, %s241
    %p250 = scmp.eq.s32.totalorder %s27, 0
    %p251 = por %p249, %p250
    %p252 = scmp.ne.s32.totalorder %s240, %s241
    %p253 = scmp.eq.s32.totalorder %s28, 3
    %p254 = por %p252, %p253
    %p256 = scmp.ne.s32.totalorder %s241, %s255
    %p257 = scmp.eq.s32.totalorder %s28, 0
    %p258 = por %p256, %p257
    %s260 = sadd.s32 %s259, 1
    %p263 = scmp.eq.s32.totalorder %s22, 3
    %p264 = scmp.ne.s32.totalorder %s259, %s261
    %p265 = scmp.eq.s32.totalorder %s22, 0
    %p266 = por %p264, %p265
    %p267 = scmp.ne.s32.totalorder %s259, %s261
    %p268 = scmp.eq.s32.totalorder %s27, 3
    %p269 = por %p267, %p268
    %p270 = scmp.ne.s32.totalorder %s261, %s262
    %p271 = scmp.eq.s32.totalorder %s27, 0
    %p272 = por %p270, %p271
    %p273 = scmp.ne.s32.totalorder %s261, %s262
    %p274 = scmp.eq.s32.totalorder %s28, 3
    %p275 = por %p273, %p274
    %p277 = scmp.ne.s32.totalorder %s262, %s276
    %p278 = scmp.eq.s32.totalorder %s28, 0
    %p279 = por %p277, %p278
    %s281 = sadd.s32 %s280, 1
    %p284 = scmp.eq.s32.totalorder %s22, 3
    %p285 = scmp.ne.s32.totalorder %s280, %s282
    %p286 = scmp.eq.s32.totalorder %s22, 0
    %p287 = por %p285, %p286
    %p288 = scmp.ne.s32.totalorder %s280, %s282
    %p289 = scmp.eq.s32.totalorder %s27, 3
    %p290 = por %p288, %p289
    %p291 = scmp.ne.s32.totalorder %s282, %s283
    %p292 = scmp.eq.s32.totalorder %s27, 0
    %p293 = por %p291, %p292
    %p294 = scmp.ne.s32.totalorder %s282, %s283
    %p295 = scmp.eq.s32.totalorder %s28, 3
    %p296 = por %p294, %p295
    %p298 = scmp.ne.s32.totalorder %s283, %s297
    %p299 = scmp.eq.s32.totalorder %s28, 0
    %p300 = por %p298, %p299
    %s302 = sadd.s32 %s301, 1
    %p305 = scmp.eq.s32.totalorder %s22, 3
    %p306 = scmp.ne.s32.totalorder %s301, %s303
    %p307 = scmp.eq.s32.totalorder %s22, 0
    %p308 = por %p306, %p307
    %p309 = scmp.ne.s32.totalorder %s301, %s303
    %p310 = scmp.eq.s32.totalorder %s27, 3
    %p311 = por %p309, %p310
    %p312 = scmp.ne.s32.totalorder %s303, %s304
    %p313 = scmp.eq.s32.totalorder %s27, 0
    %p314 = por %p312, %p313
    %p315 = scmp.ne.s32.totalorder %s303, %s304
    %p316 = scmp.eq.s32.totalorder %s28, 3
    %p317 = por %p315, %p316
    %p319 = scmp.ne.s32.totalorder %s304, %s318
    %p320 = scmp.eq.s32.totalorder %s28, 0
    %p321 = por %p319, %p320
    %s323 = sadd.s32 %s322, 1
    %p326 = scmp.eq.s32.totalorder %s22, 3
    %p327 = scmp.ne.s32.totalorder %s322, %s324
    %p328 = scmp.eq.s32.totalorder %s22, 0
    %p329 = por %p327, %p328
    %p330 = scmp.ne.s32.totalorder %s322, %s324
    %p331 = scmp.eq.s32.totalorder %s27, 3
    %p332 = por %p330, %p331
    %p333 = scmp.ne.s32.totalorder %s324, %s325
    %p334 = scmp.eq.s32.totalorder %s27, 0
    %p335 = por %p333, %p334
    %p336 = scmp.ne.s32.totalorder %s324, %s325
    %p337 = scmp.eq.s32.totalorder %s28, 3
    %p338 = por %p336, %p337
    %p340 = scmp.ne.s32.totalorder %s325, %s339
    %p341 = scmp.eq.s32.totalorder %s28, 0
    %p342 = por %p340, %p341
    %s344 = sadd.s32 %s343, 1
    %p347 = scmp.eq.s32.totalorder %s22, 3
    %p348 = scmp.ne.s32.totalorder %s343, %s345
    %p349 = scmp.eq.s32.totalorder %s22, 0
    %p350 = por %p348, %p349
    %p351 = scmp.ne.s32.totalorder %s343, %s345
    %p352 = scmp.eq.s32.totalorder %s27, 3
    %p353 = por %p351, %p352
    %p354 = scmp.ne.s32.totalorder %s345, %s346
    %p355 = scmp.eq.s32.totalorder %s27, 0
    %p356 = por %p354, %p355
    %p357 = scmp.ne.s32.totalorder %s345, %s346
    %p358 = scmp.eq.s32.totalorder %s28, 3
    %p359 = por %p357, %p358
    %p361 = scmp.ne.s32.totalorder %s346, %s360
    %p362 = scmp.eq.s32.totalorder %s28, 0
    %p363 = por %p361, %p362
    %s364 = ssub.s32 %s29, %s41
    %p365 = scmp.eq.s32.totalorder %s364, 0
    %s367 = sadd.s32 %s366, 1
    %s368 = scalar_select %p365, %s366, %s367
    %p371 = pneg %p365
    %p372 = scmp.eq.s32.totalorder %s22, 3
    %p373 = por %p371, %p372
    %p374 = scmp.ne.s32.totalorder %s366, %s369
    %p375 = scmp.eq.s32.totalorder %s22, 0
    %p376 = por %p374, %p375
    %p377 = scmp.ne.s32.totalorder %s366, %s369
    %p378 = scmp.eq.s32.totalorder %s27, 3
    %p379 = por %p377, %p378
    %p380 = scmp.ne.s32.totalorder %s369, %s370
    %p381 = scmp.eq.s32.totalorder %s27, 0
    %p382 = por %p380, %p381
    %p383 = scmp.ne.s32.totalorder %s369, %s370
    %p384 = scmp.eq.s32.totalorder %s28, 3
    %p385 = por %p383, %p384
    %p387 = scmp.ne.s32.totalorder %s370, %s386
    %p388 = scmp.eq.s32.totalorder %s28, 0
    %p389 = por %p387, %p388
    %s390 = ssub.s32 %s29, %s41
    %s391 = ssub.s32 %s30, %s37
    %s392 = sor.u32 %s390, %s391
    %p393 = scmp.eq.s32.totalorder %s392, 0
    %s395 = sadd.s32 %s394, 1
    %s396 = scalar_select %p393, %s394, %s395
    %p399 = pneg %p393
    %p400 = scmp.eq.s32.totalorder %s22, 3
    %p401 = por %p399, %p400
    %p402 = scmp.ne.s32.totalorder %s394, %s397
    %p403 = scmp.eq.s32.totalorder %s22, 0
    %p404 = por %p402, %p403
    %p405 = scmp.ne.s32.totalorder %s394, %s397
    %p406 = scmp.eq.s32.totalorder %s27, 3
    %p407 = por %p405, %p406
    %p408 = scmp.ne.s32.totalorder %s397, %s398
    %p409 = scmp.eq.s32.totalorder %s27, 0
    %p410 = por %p408, %p409
    %p411 = scmp.ne.s32.totalorder %s397, %s398
    %p412 = scmp.eq.s32.totalorder %s28, 3
    %p413 = por %p411, %p412
    %p415 = scmp.ne.s32.totalorder %s398, %s414
    %p416 = scmp.eq.s32.totalorder %s28, 0
    %p417 = por %p415, %p416
    %p418 = scmp.le.s32.totalorder 1, %s22
    %p419 = scmp.lt.s32.totalorder %s22, 5
    %p420 = pnand %p418, %p419
    %p421 = pneg %p420
    // Predicated region
    $region9: #{mlpmixer_forward.2} parent=5 // pred_check
      _
    $region10: #{mlpmixer_forward.2} parent=5 // pred_check_branch
      %423 = sbr.rel (%p420) target = $region12
    $region11: #{mlpmixer_forward.2} parent=5 // pred_region
      %s424 = ssub.s32 %s22, 1
      // Predicated region
      $region13: #{mlpmixer_forward.2} parent=11 // pred_check
        %p425 = pneg %p83
      $region14: #{mlpmixer_forward.2} parent=11 // pred_check_branch
        %427 = sbr.rel (%p425) target = $region16
      $region15: #{mlpmixer_forward.2} parent=11 // pred_region
        _
      $region16: #{mlpmixer_forward.2} parent=11 // pred_fallthru
        _
      // Predicated region
      $region17: #{mlpmixer_forward.2} parent=11 // pred_check
        %p428 = pneg %p104
      $region18: #{mlpmixer_forward.2} parent=11 // pred_check_branch
        %430 = sbr.rel (%p428) target = $region20
      $region19: #{mlpmixer_forward.2} parent=11 // pred_region
        _
      $region20: #{mlpmixer_forward.2} parent=11 // pred_fallthru
        _
      // Predicated region
      $region21: #{mlpmixer_forward.2} parent=11 // pred_check
        %p431 = pneg %p125
      $region22: #{mlpmixer_forward.2} parent=11 // pred_check_branch
        %433 = sbr.rel (%p431) target = $region24
      $region23: #{mlpmixer_forward.2} parent=11 // pred_region
        _
      $region24: #{mlpmixer_forward.2} parent=11 // pred_fallthru
        _
      // Predicated region
      $region25: #{mlpmixer_forward.2} parent=11 // pred_check
        %p434 = pneg %p146
      $region26: #{mlpmixer_forward.2} parent=11 // pred_check_branch
        %436 = sbr.rel (%p434) target = $region28
      $region27: #{mlpmixer_forward.2} parent=11 // pred_region
        _
      $region28: #{mlpmixer_forward.2} parent=11 // pred_fallthru
        _
      // Predicated region
      $region29: #{mlpmixer_forward.2} parent=11 // pred_check
        %p437 = pneg %p167
      $region30: #{mlpmixer_forward.2} parent=11 // pred_check_branch
        %439 = sbr.rel (%p437) target = $region32
      $region31: #{mlpmixer_forward.2} parent=11 // pred_region
        _
      $region32: #{mlpmixer_forward.2} parent=11 // pred_fallthru
        _
      // Predicated region
      $region33: #{mlpmixer_forward.2} parent=11 // pred_check
        %p440 = pneg %p188
      $region34: #{mlpmixer_forward.2} parent=11 // pred_check_branch
        %442 = sbr.rel (%p440) target = $region36
      $region35: #{mlpmixer_forward.2} parent=11 // pred_region
        _
      $region36: #{mlpmixer_forward.2} parent=11 // pred_fallthru
        _
      // Predicated region
      $region37: #{mlpmixer_forward.2} parent=11 // pred_check
        %p443 = pneg %p209
      $region38: #{mlpmixer_forward.2} parent=11 // pred_check_branch
        %445 = sbr.rel (%p443) target = $region40
      $region39: #{mlpmixer_forward.2} parent=11 // pred_region
        _
      $region40: #{mlpmixer_forward.2} parent=11 // pred_fallthru
        _
      // Predicated region
      $region41: #{mlpmixer_forward.2} parent=11 // pred_check
        %p446 = pneg %p230
      $region42: #{mlpmixer_forward.2} parent=11 // pred_check_branch
        %448 = sbr.rel (%p446) target = $region44
      $region43: #{mlpmixer_forward.2} parent=11 // pred_region
        _
      $region44: #{mlpmixer_forward.2} parent=11 // pred_fallthru
        _
      // Predicated region
      $region45: #{mlpmixer_forward.2} parent=11 // pred_check
        %p449 = pneg %p251
      $region46: #{mlpmixer_forward.2} parent=11 // pred_check_branch
        %451 = sbr.rel (%p449) target = $region48
      $region47: #{mlpmixer_forward.2} parent=11 // pred_region
        _
      $region48: #{mlpmixer_forward.2} parent=11 // pred_fallthru
        _
      // Predicated region
      $region49: #{mlpmixer_forward.2} parent=11 // pred_check
        %p452 = pneg %p272
      $region50: #{mlpmixer_forward.2} parent=11 // pred_check_branch
        %454 = sbr.rel (%p452) target = $region52
      $region51: #{mlpmixer_forward.2} parent=11 // pred_region
        _
      $region52: #{mlpmixer_forward.2} parent=11 // pred_fallthru
        _
      // Predicated region
      $region53: #{mlpmixer_forward.2} parent=11 // pred_check
        %p455 = pneg %p293
      $region54: #{mlpmixer_forward.2} parent=11 // pred_check_branch
        %457 = sbr.rel (%p455) target = $region56
      $region55: #{mlpmixer_forward.2} parent=11 // pred_region
        _
      $region56: #{mlpmixer_forward.2} parent=11 // pred_fallthru
        _
      // Predicated region
      $region57: #{mlpmixer_forward.2} parent=11 // pred_check
        %p458 = pneg %p314
      $region58: #{mlpmixer_forward.2} parent=11 // pred_check_branch
        %460 = sbr.rel (%p458) target = $region60
      $region59: #{mlpmixer_forward.2} parent=11 // pred_region
        _
      $region60: #{mlpmixer_forward.2} parent=11 // pred_fallthru
        _
      // Predicated region
      $region61: #{mlpmixer_forward.2} parent=11 // pred_check
        %p461 = pneg %p335
      $region62: #{mlpmixer_forward.2} parent=11 // pred_check_branch
        %463 = sbr.rel (%p461) target = $region64
      $region63: #{mlpmixer_forward.2} parent=11 // pred_region
        _
      $region64: #{mlpmixer_forward.2} parent=11 // pred_fallthru
        _
      // Predicated region
      $region65: #{mlpmixer_forward.2} parent=11 // pred_check
        %p464 = pneg %p356
      $region66: #{mlpmixer_forward.2} parent=11 // pred_check_branch
        %466 = sbr.rel (%p464) target = $region68
      $region67: #{mlpmixer_forward.2} parent=11 // pred_region
        _
      $region68: #{mlpmixer_forward.2} parent=11 // pred_fallthru
        _
    $region12: #{mlpmixer_forward.2} parent=5 // pred_fallthru
      _
    %p467 = scmp.lt.s32.totalorder %s22, 4
    // Predicated region
    $region69: #{mlpmixer_forward.2} parent=5 // pred_check
      %p468 = pneg %p467
    $region70: #{mlpmixer_forward.2} parent=5 // pred_check_branch
      %470 = sbr.rel (%p468) target = $region72
    $region71: #{mlpmixer_forward.2} parent=5 // pred_region
      // Predicated region
      $region73: #{mlpmixer_forward.2} parent=71 // pred_check
        %p471 = pneg %p56
      $region74: #{mlpmixer_forward.2} parent=71 // pred_check_branch
        %473 = sbr.rel (%p471) target = $region76
      $region75: #{mlpmixer_forward.2} parent=71 // pred_region
        %p474 = scmp.lt.s32.totalorder %s29, 3
        %s475 = scalar_select %p474, %s29, 3
        %p476 = scmp.lt.s32.totalorder %s30, 0
        %s477 = scalar_select %p476, %s30, 0
        %s478 = sadd.s32 %s477, %s475
        %s479 = smul.addr %s478, 8
        %s480 = scalar_lea.vmem %s0, %s479
      $region76: #{mlpmixer_forward.2} parent=71 // pred_fallthru
        _
      // Predicated region
      $region77: #{mlpmixer_forward.2} parent=71 // pred_check
        %p481 = pneg %p376
      $region78: #{mlpmixer_forward.2} parent=71 // pred_check_branch
        %483 = sbr.rel (%p481) target = $region80
      $region79: #{mlpmixer_forward.2} parent=71 // pred_region
        %p484 = scmp.lt.s32.totalorder %s29, 3
        %s485 = scalar_select %p484, %s29, 3
        %s486 = scalar_lea.vmem %s15, %s485
      $region80: #{mlpmixer_forward.2} parent=71 // pred_fallthru
        _
    $region72: #{mlpmixer_forward.2} parent=5 // pred_fallthru
      _
    %p487 = scmp.le.s32.totalorder 1, %s22
    %p488 = scmp.lt.s32.totalorder %s22, 5
    %p489 = pnand %p487, %p488
    %p490 = pneg %p489
    // Predicated region
    $region81: #{mlpmixer_forward.2} parent=5 // pred_check
      _
    $region82: #{mlpmixer_forward.2} parent=5 // pred_check_branch
      %492 = sbr.rel (%p489) target = $region84
    $region83: #{mlpmixer_forward.2} parent=5 // pred_region
      %s493 = ssub.s32 %s22, 1
      %p494 = scmp.lt.s32.totalorder %s31, 3
      %s495 = scalar_select %p494, %s31, 3
      %p496 = scmp.lt.s32.totalorder %s32, 0
      %s497 = scalar_select %p496, %s32, 0
      %s498 = sadd.s32 %s497, %s495
      %s499 = smul.addr %s498, 8
      %s500 = scalar_lea.vmem %s0, %s499
      %p501 = pneg %p62
      %p502 = pneg %p59
      %p503 = pneg %p83
      %p504 = pneg %p80
      %p505 = pneg %p104
      %p506 = pneg %p101
      %p507 = pneg %p125
      %p508 = pneg %p122
      %p509 = pneg %p146
      %p510 = pneg %p143
      %p511 = pneg %p167
      %p512 = pneg %p164
      %p513 = pneg %p188
      %p514 = pneg %p185
      %p515 = pneg %p209
      %p516 = pneg %p206
      %p517 = pneg %p230
      %p518 = pneg %p227
      %p519 = pneg %p251
      %p520 = pneg %p248
      %p521 = pneg %p272
      %p522 = pneg %p269
      %p523 = pneg %p293
      %p524 = pneg %p290
      %p525 = pneg %p314
      %p526 = pneg %p311
      %p527 = pneg %p335
      %p528 = pneg %p332
      %p529 = pneg %p356
      %p530 = pneg %p353
      %p531 = scmp.lt.s32.totalorder %s31, 3
      %s532 = scalar_select %p531, %s31, 3
      %s533 = scalar_lea.vmem %s15, %s532
      %p534 = pneg %p382
      %p535 = pneg %p379
      %p536 = pneg %p410
      %p537 = pneg %p407
      %p538 = scmp.lt.s32.totalorder %s31, 3
      %s539 = scalar_select %p538, %s31, 3
      %p540 = scmp.lt.s32.totalorder %s32, 0
      %s541 = scalar_select %p540, %s32, 0
      %s542 = sadd.s32 %s541, %s539
      %s543 = smul.addr %s542, 8
      %s544 = scalar_lea.vmem %s16, %s543
      %p545 = scmp.lt.s32.totalorder %s31, 3
      %s546 = scalar_select %p545, %s31, 3
      %p547 = scmp.lt.s32.totalorder %s32, 0
      %s548 = scalar_select %p547, %s32, 0
      %s549 = sadd.s32 %s548, %s546
      %s550 = smul.addr %s549, 8
      %s551 = scalar_lea.vmem %s0, %s550
      %p552 = scmp.lt.s32.totalorder %s31, 3
      %s553 = scalar_select %p552, %s31, 3
      %s554 = scalar_lea.vmem %s15, %s553
      %p555 = scmp.lt.s32.totalorder %s31, 3
      %s556 = scalar_select %p555, %s31, 3
      %p557 = scmp.lt.s32.totalorder %s32, 0
      %s558 = scalar_select %p557, %s32, 0
      %s559 = sadd.s32 %s558, %s556
      %s560 = smul.addr %s559, 8
      %s561 = scalar_lea.vmem %s16, %s560
      %v563 = vld [vmem:[%s551] sm:$0xff]
      %v564 = vlaneseq
      %v565 = vand.u32 %v564, 127
      %566 = vset.pattern.permute.xlu0 0
      %567 = vperm.xlu0 %566, %v563
      %v568 = vpop.permute.xlu0 %567
      %vm569 = vcmp.eq.s32.totalorder %v568, %v565
      %v570 = vsel %vm569, 1, 0
      %v571 = vcvt.s32.f32 %v570
      %v572 = vld [vmem:[%s1] sm:$0xff]
      %v573 = vld [vmem:[%s1 + $0x8] sm:$0xff]
      %v574 = vld [vmem:[%s1 + $0x10] sm:$0xff]
      %v575 = vld [vmem:[%s1 + $0x18] sm:$0xff]
      %v576 = vld [vmem:[%s1 + $0x20] sm:$0xff]
      %v577 = vld [vmem:[%s1 + $0x28] sm:$0xff]
      %v578 = vld [vmem:[%s1 + $0x30] sm:$0xff]
      %v579 = vld [vmem:[%s1 + $0x38] sm:$0xff]
      %vm580 = vcmask 523264
      %v582 = vsel %vm580, %v571, 0
      %584 = vmatprep.subr.mxu0 0.0
      %585 = vmatpush1.msra.mxu0 %v572
      %586 = vmatprep.subr.mxu0 0.0
      %587 = vmatpush1.msra.mxu0 %v573
      %588 = vmatprep.subr.mxu0 0.0
      %589 = vmatpush1.msra.mxu0 %v574
      %590 = vmatprep.subr.mxu0 0.0
      %591 = vmatpush1.msra.mxu0 %v575
      %592 = vmatprep.subr.mxu0 0.0
      %593 = vmatpush1.msra.mxu0 %v576
      %594 = vmatprep.subr.mxu0 0.0
      %595 = vmatpush1.msra.mxu0 %v577
      %596 = vmatprep.subr.mxu0 0.0
      %597 = vmatpush1.msra.mxu0 %v578
      %598 = vmatprep.subr.mxu0 0.0
      %599 = vmatpush1.msra.mxu0 %v579
      %600 = vmatprep.subr.mxu0 0.0
      %601 = vmatpush1.msra.mxu0 0.0
      %602 = vmatprep.subr.mxu0 0.0
      %603 = vmatpush1.msra.mxu0 0.0
      %604 = vmatprep.subr.mxu0 0.0
      %605 = vmatpush1.msra.mxu0 0.0
      %606 = vmatprep.subr.mxu0 0.0
      %607 = vmatpush1.msra.mxu0 0.0
      %608 = vmatprep.subr.mxu0 0.0
      %609 = vmatpush1.msra.mxu0 0.0
      %610 = vmatprep.subr.mxu0 0.0
      %611 = vmatpush1.msra.mxu0 0.0
      %612 = vmatprep.subr.mxu0 0.0
      %613 = vmatpush1.msra.mxu0 0.0
      %614 = vmatprep.subr.mxu0 0.0
      %615 = vmatpush1.msra.mxu0 0.0
      %616 = vmatprep.subr.mxu0 0.0
      %617 = vmatpush1.msra.mxu0 0.0
      %618 = vmatprep.subr.mxu0 0.0
      %619 = vmatpush1.msra.mxu0 0.0
      %620 = vmatprep.subr.mxu0 0.0
      %621 = vmatpush1.msra.mxu0 0.0
      %622 = vmatprep.subr.mxu0 0.0
      %623 = vmatpush1.msra.mxu0 0.0
      %624 = vmatprep.subr.mxu0 0.0
      %625 = vmatpush1.msra.mxu0 0.0
      %626 = vmatprep.subr.mxu0 0.0
      %627 = vmatpush1.msra.mxu0 0.0
      %628 = vmatprep.subr.mxu0 0.0
      %629 = vmatpush1.msra.mxu0 0.0
      %630 = vmatprep.subr.mxu0 0.0
      %631 = vmatpush1.msra.mxu0 0.0
      %632 = vmatprep.subr.mxu0 0.0
      %633 = vmatpush1.msra.mxu0 0.0
      %634 = vmatprep.subr.mxu0 0.0
      %635 = vmatpush1.msra.mxu0 0.0
      %636 = vmatprep.subr.mxu0 0.0
      %637 = vmatpush1.msra.mxu0 0.0
      %638 = vmatprep.subr.mxu0 0.0
      %639 = vmatpush1.msra.mxu0 0.0
      %640 = vmatprep.subr.mxu0 0.0
      %641 = vmatpush1.msra.mxu0 0.0
      %642 = vmatprep.subr.mxu0 0.0
      %643 = vmatpush1.msra.mxu0 0.0
      %644 = vmatprep.subr.mxu0 0.0
      %645 = vmatpush1.msra.mxu0 0.0
      %646 = vmatprep.subr.mxu0 0.0
      %647 = vmatpush1.msra.mxu0 0.0
      %648 = vmatprep.mubr.f32.mxu0 0.0
      %649 = vmatmul.mubr.f32.gmra.mrb[0].mxu0 %v582
      %v650 = vpop.f32.mrb[0].mxu0
      %v651 = vadd.f32 0.0, %v650
      %v652 = vpop.f32.mrb[0].mxu0
      %653 = vdwg.mxu0
      %vm654 = vcmask 261120
      %v655 = vsel %vm654, %v651, 0.0
      %656 = vadd.xlane.f32.xlu0 %v655
      %v657 = vpop.xlane.xlu0 %656
      %v658 = vmul.f32 %v657, 0.03125
      %v659 = vsub.f32 %v651, %v658
      %v660 = vmul.f32 %v659, %v659
      %v661 = vsel %vm654, %v660, 0.0
      %662 = vadd.xlane.f32.xlu0 %v661
      %v663 = vpop.xlane.xlu0 %662
      %v664 = vmul.f32 %v663, 0.03125
      %v665 = vadd.f32 %v664, 1e-05
      %v666 = vrsqrt.pop %v665
      %v667 = vmul.f32 %v659, %v666
      %v668 = vld [vmem:[%s2] sm:$0x1]
      %v670 = vlaneseq
      %v671 = vshrl.u32 %v670, 7
      %v672 = vsub.s32 0, %v671
      %v673 = vrot.slane %v668, %v672
      %v675 = vmul.f32 %v667, %v673
      %v676 = vld [vmem:[%s3] sm:$0x1]
      %v678 = vlaneseq
      %v679 = vshrl.u32 %v678, 7
      %v680 = vsub.s32 0, %v679
      %v681 = vrot.slane %v676, %v680
      %v683 = vadd.f32 %v675, %v681
      %v684 = vpack.c.bf16 %v683, %v683
      %v685 = vld [vmem:[%s4] sm:$0xf]
      %v686 = vld [vmem:[%s4 + $0x4] sm:$0xf]
      %v687 = vld [vmem:[%s4 + $0x8] sm:$0xf]
      %v688 = vld [vmem:[%s4 + $0xc] sm:$0xf]
      %v689 = vld [vmem:[%s5] sm:$0x1]
      %v691 = vlaneseq
      %v692 = vshrl.u32 %v691, 7
      %v693 = vsub.s32 0, %v692
      %v694 = vrot.slane %v689, %v693
      %v700 = vunpack.c.l.b16 %v685
      %v701 = vunpack.c.l.b16 %v686
      %v702 = vunpack.c.l.b16 %v687
      %v703 = vunpack.c.l.b16 %v688
      %v704 = vpack.c.b16 %v701, %v700
      %v705 = vpack.c.b16 %v703, %v702
      %v709 = vsel %vm654, %v684, 0
      %711 = vmatprep.subr.bf16.mxu0 0
      %712 = vmatpush1.bf16.msra.mxu0 %v704
      %713 = vmatprep.subr.bf16.mxu0 0
      %714 = vmatpush1.bf16.msra.mxu0 %v705
      %715 = vmatprep.subr.bf16.mxu0 0
      %716 = vmatpush1.bf16.msra.mxu0 0
      %717 = vmatprep.subr.bf16.mxu0 0
      %718 = vmatpush1.bf16.msra.mxu0 0
      %719 = vmatprep.subr.bf16.mxu0 0
      %720 = vmatpush1.bf16.msra.mxu0 0
      %721 = vmatprep.subr.bf16.mxu0 0
      %722 = vmatpush1.bf16.msra.mxu0 0
      %723 = vmatprep.subr.bf16.mxu0 0
      %724 = vmatpush1.bf16.msra.mxu0 0
      %725 = vmatprep.subr.bf16.mxu0 0
      %726 = vmatpush1.bf16.msra.mxu0 0
      %727 = vmatprep.subr.bf16.mxu0 0
      %728 = vmatpush1.bf16.msra.mxu0 0
      %729 = vmatprep.subr.bf16.mxu0 0
      %730 = vmatpush1.bf16.msra.mxu0 0
      %731 = vmatprep.subr.bf16.mxu0 0
      %732 = vmatpush1.bf16.msra.mxu0 0
      %733 = vmatprep.subr.bf16.mxu0 0
      %734 = vmatpush1.bf16.msra.mxu0 0
      %735 = vmatprep.subr.bf16.mxu0 0
      %736 = vmatpush1.bf16.msra.mxu0 0
      %737 = vmatprep.subr.bf16.mxu0 0
      %738 = vmatpush1.bf16.msra.mxu0 0
      %739 = vmatprep.subr.bf16.mxu0 0
      %740 = vmatpush1.bf16.msra.mxu0 0
      %741 = vmatprep.subr.bf16.mxu0 0
      %742 = vmatpush1.bf16.msra.mxu0 0
      %743 = vmatprep.mubr.bf16.mxu0 0
      %744 = vmatmul.mubr.bf16.gmra.mrb[0].mxu0 %v709
      %v745 = vpop.f32.mrb[0].mxu0
      %v746 = vadd.f32 %v694, %v745
      %v747 = vpop.f32.mrb[0].mxu0
      %v748 = vpop.f32.mrb[0].mxu0
      %v749 = vpop.f32.mrb[0].mxu0
      %750 = vdwg.mxu0
      %v751 = vmul.f32 %v746, 0.5
      %v752 = vmul.f32 %v746, 0.044715
      %v753 = vmul.f32 %v752, %v746
      %v754 = vmul.f32 %v753, %v746
      %v755 = vadd.f32 %v746, %v754
      %v756 = vmul.f32 %v755, 0.7978846
      %v757 = vtanh.pop %v756
      %v758 = vadd.f32 %v757, 1.0
      %v759 = vmul.f32 %v751, %v758
      %v760 = vpack.c.bf16 %v759, %v759
      %v761 = vld [vmem:[%s6] sm:$0xf]
      %v762 = vld [vmem:[%s6 + $0x4] sm:$0xf]
      %v763 = vld [vmem:[%s6 + $0x8] sm:$0xf]
      %v764 = vld [vmem:[%s6 + $0xc] sm:$0xf]
      %v765 = vld [vmem:[%s6 + $0x10] sm:$0xf]
      %v766 = vld [vmem:[%s6 + $0x14] sm:$0xf]
      %v767 = vld [vmem:[%s6 + $0x18] sm:$0xf]
      %v768 = vld [vmem:[%s6 + $0x1c] sm:$0xf]
      %v769 = vld [vmem:[%s7] sm:$0x1]
      %v771 = vlaneseq
      %v772 = vshrl.u32 %v771, 7
      %v773 = vsub.s32 0, %v772
      %v774 = vrot.slane %v769, %v773
      %v784 = vunpack.c.l.b16 %v761
      %v785 = vunpack.c.l.b16 %v762
      %v786 = vunpack.c.l.b16 %v763
      %v787 = vunpack.c.l.b16 %v764
      %v788 = vunpack.c.l.b16 %v765
      %v789 = vunpack.c.l.b16 %v766
      %v790 = vunpack.c.l.b16 %v767
      %v791 = vunpack.c.l.b16 %v768
      %v792 = vpack.c.b16 %v785, %v784
      %v793 = vpack.c.b16 %v787, %v786
      %v794 = vpack.c.b16 %v789, %v788
      %v795 = vpack.c.b16 %v791, %v790
      %v801 = vsel %vm580, %v760, 0
      %803 = vmatprep.subr.bf16.mxu0 0
      %804 = vmatpush1.bf16.msra.mxu0 %v792
      %805 = vmatprep.subr.bf16.mxu0 0
      %806 = vmatpush1.bf16.msra.mxu0 %v793
      %807 = vmatprep.subr.bf16.mxu0 0
      %808 = vmatpush1.bf16.msra.mxu0 %v794
      %809 = vmatprep.subr.bf16.mxu0 0
      %810 = vmatpush1.bf16.msra.mxu0 %v795
      %811 = vmatprep.subr.bf16.mxu0 0
      %812 = vmatpush1.bf16.msra.mxu0 0
      %813 = vmatprep.subr.bf16.mxu0 0
      %814 = vmatpush1.bf16.msra.mxu0 0
      %815 = vmatprep.subr.bf16.mxu0 0
      %816 = vmatpush1.bf16.msra.mxu0 0
      %817 = vmatprep.subr.bf16.mxu0 0
      %818 = vmatpush1.bf16.msra.mxu0 0
      %819 = vmatprep.subr.bf16.mxu0 0
      %820 = vmatpush1.bf16.msra.mxu0 0
      %821 = vmatprep.subr.bf16.mxu0 0
      %822 = vmatpush1.bf16.msra.mxu0 0
      %823 = vmatprep.subr.bf16.mxu0 0
      %824 = vmatpush1.bf16.msra.mxu0 0
      %825 = vmatprep.subr.bf16.mxu0 0
      %826 = vmatpush1.bf16.msra.mxu0 0
      %827 = vmatprep.subr.bf16.mxu0 0
      %828 = vmatpush1.bf16.msra.mxu0 0
      %829 = vmatprep.subr.bf16.mxu0 0
      %830 = vmatpush1.bf16.msra.mxu0 0
      %831 = vmatprep.subr.bf16.mxu0 0
      %832 = vmatpush1.bf16.msra.mxu0 0
      %833 = vmatprep.subr.bf16.mxu0 0
      %834 = vmatpush1.bf16.msra.mxu0 0
      %835 = vmatprep.mubr.bf16.mxu0 0
      %836 = vmatmul.mubr.bf16.gmra.mrb[0].mxu0 %v801
      %v837 = vpop.f32.mrb[0].mxu0
      %v838 = vadd.f32 %v774, %v837
      %v839 = vpop.f32.mrb[0].mxu0
      %v840 = vpop.f32.mrb[0].mxu0
      %v841 = vpop.f32.mrb[0].mxu0
      %842 = vdwg.mxu0
      %v843 = vadd.f32 %v651, %v838
      %v844 = vsel %vm654, %v843, 0.0
      %845 = vadd.xlane.f32.xlu0 %v844
      %v846 = vpop.xlane.xlu0 %845
      %v847 = vmul.f32 %v846, 0.03125
      %v848 = vsub.f32 %v843, %v847
      %v849 = vmul.f32 %v848, %v848
      %v850 = vsel %vm654, %v849, 0.0
      %851 = vadd.xlane.f32.xlu0 %v850
      %v852 = vpop.xlane.xlu0 %851
      %v853 = vmul.f32 %v852, 0.03125
      %v854 = vadd.f32 %v853, 1e-05
      %v855 = vrsqrt.pop %v854
      %v856 = vmul.f32 %v848, %v855
      %v857 = vld [vmem:[%s8] sm:$0x1]
      %v859 = vlaneseq
      %v860 = vshrl.u32 %v859, 7
      %v861 = vsub.s32 0, %v860
      %v862 = vrot.slane %v857, %v861
      %v864 = vmul.f32 %v856, %v862
      %v865 = vld [vmem:[%s9] sm:$0x1]
      %v867 = vlaneseq
      %v868 = vshrl.u32 %v867, 7
      %v869 = vsub.s32 0, %v868
      %v870 = vrot.slane %v865, %v869
      %v872 = vadd.f32 %v864, %v870
      %v873 = vpack.c.bf16 %v872, %v872
      %v874 = vld [vmem:[%s10] sm:$0xf]
      %v875 = vld [vmem:[%s10 + $0x4] sm:$0xf]
      %v876 = vld [vmem:[%s10 + $0x8] sm:$0xf]
      %v877 = vld [vmem:[%s10 + $0xc] sm:$0xf]
      %v878 = vld [vmem:[%s11] sm:$0x1]
      %v880 = vlaneseq
      %v881 = vshrl.u32 %v880, 7
      %v882 = vsub.s32 0, %v881
      %v883 = vrot.slane %v878, %v882
      %v889 = vunpack.c.l.b16 %v874
      %v890 = vunpack.c.l.b16 %v875
      %v891 = vunpack.c.l.b16 %v876
      %v892 = vunpack.c.l.b16 %v877
      %v893 = vpack.c.b16 %v890, %v889
      %v894 = vpack.c.b16 %v892, %v891
      %v898 = vsel %vm654, %v873, 0
      %900 = vmatprep.subr.bf16.mxu0 0
      %901 = vmatpush1.bf16.msra.mxu0 %v893
      %902 = vmatprep.subr.bf16.mxu0 0
      %903 = vmatpush1.bf16.msra.mxu0 %v894
      %904 = vmatprep.subr.bf16.mxu0 0
      %905 = vmatpush1.bf16.msra.mxu0 0
      %906 = vmatprep.subr.bf16.mxu0 0
      %907 = vmatpush1.bf16.msra.mxu0 0
      %908 = vmatprep.subr.bf16.mxu0 0
      %909 = vmatpush1.bf16.msra.mxu0 0
      %910 = vmatprep.subr.bf16.mxu0 0
      %911 = vmatpush1.bf16.msra.mxu0 0
      %912 = vmatprep.subr.bf16.mxu0 0
      %913 = vmatpush1.bf16.msra.mxu0 0
      %914 = vmatprep.subr.bf16.mxu0 0
      %915 = vmatpush1.bf16.msra.mxu0 0
      %916 = vmatprep.subr.bf16.mxu0 0
      %917 = vmatpush1.bf16.msra.mxu0 0
      %918 = vmatprep.subr.bf16.mxu0 0
      %919 = vmatpush1.bf16.msra.mxu0 0
      %920 = vmatprep.subr.bf16.mxu0 0
      %921 = vmatpush1.bf16.msra.mxu0 0
      %922 = vmatprep.subr.bf16.mxu0 0
      %923 = vmatpush1.bf16.msra.mxu0 0
      %924 = vmatprep.subr.bf16.mxu0 0
      %925 = vmatpush1.bf16.msra.mxu0 0
      %926 = vmatprep.subr.bf16.mxu0 0
      %927 = vmatpush1.bf16.msra.mxu0 0
      %928 = vmatprep.subr.bf16.mxu0 0
      %929 = vmatpush1.bf16.msra.mxu0 0
      %930 = vmatprep.subr.bf16.mxu0 0
      %931 = vmatpush1.bf16.msra.mxu0 0
      %932 = vmatprep.mubr.bf16.mxu0 0
      %933 = vmatmul.mubr.bf16.gmra.mrb[0].mxu0 %v898
      %v934 = vpop.f32.mrb[0].mxu0
      %v935 = vadd.f32 %v883, %v934
      %v936 = vpop.f32.mrb[0].mxu0
      %v937 = vpop.f32.mrb[0].mxu0
      %v938 = vpop.f32.mrb[0].mxu0
      %939 = vdwg.mxu0
      %v940 = vmul.f32 %v935, 0.5
      %v941 = vmul.f32 %v935, 0.044715
      %v942 = vmul.f32 %v941, %v935
      %v943 = vmul.f32 %v942, %v935
      %v944 = vadd.f32 %v935, %v943
      %v945 = vmul.f32 %v944, 0.7978846
      %v946 = vtanh.pop %v945
      %v947 = vadd.f32 %v946, 1.0
      %v948 = vmul.f32 %v940, %v947
      %v949 = vpack.c.bf16 %v948, %v948
      %v950 = vld [vmem:[%s12] sm:$0xf]
      %v951 = vld [vmem:[%s12 + $0x4] sm:$0xf]
      %v952 = vld [vmem:[%s12 + $0x8] sm:$0xf]
      %v953 = vld [vmem:[%s12 + $0xc] sm:$0xf]
      %v954 = vld [vmem:[%s12 + $0x10] sm:$0xf]
      %v955 = vld [vmem:[%s12 + $0x14] sm:$0xf]
      %v956 = vld [vmem:[%s12 + $0x18] sm:$0xf]
      %v957 = vld [vmem:[%s12 + $0x1c] sm:$0xf]
      %v958 = vld [vmem:[%s13] sm:$0x1]
      %v960 = vlaneseq
      %v961 = vshrl.u32 %v960, 7
      %v962 = vsub.s32 0, %v961
      %v963 = vrot.slane %v958, %v962
      %v973 = vunpack.c.l.b16 %v950
      %v974 = vunpack.c.l.b16 %v951
      %v975 = vunpack.c.l.b16 %v952
      %v976 = vunpack.c.l.b16 %v953
      %v977 = vunpack.c.l.b16 %v954
      %v978 = vunpack.c.l.b16 %v955
      %v979 = vunpack.c.l.b16 %v956
      %v980 = vunpack.c.l.b16 %v957
      %v981 = vpack.c.b16 %v974, %v973
      %v982 = vpack.c.b16 %v976, %v975
      %v983 = vpack.c.b16 %v978, %v977
      %v984 = vpack.c.b16 %v980, %v979
      %v990 = vsel %vm580, %v949, 0
      %992 = vmatprep.subr.bf16.mxu0 0
      %993 = vmatpush1.bf16.msra.mxu0 %v981
      %994 = vmatprep.subr.bf16.mxu0 0
      %995 = vmatpush1.bf16.msra.mxu0 %v982
      %996 = vmatprep.subr.bf16.mxu0 0
      %997 = vmatpush1.bf16.msra.mxu0 %v983
      %998 = vmatprep.subr.bf16.mxu0 0
      %999 = vmatpush1.bf16.msra.mxu0 %v984
      %1000 = vmatprep.subr.bf16.mxu0 0
      %1001 = vmatpush1.bf16.msra.mxu0 0
      %1002 = vmatprep.subr.bf16.mxu0 0
      %1003 = vmatpush1.bf16.msra.mxu0 0
      %1004 = vmatprep.subr.bf16.mxu0 0
      %1005 = vmatpush1.bf16.msra.mxu0 0
      %1006 = vmatprep.subr.bf16.mxu0 0
      %1007 = vmatpush1.bf16.msra.mxu0 0
      %1008 = vmatprep.subr.bf16.mxu0 0
      %1009 = vmatpush1.bf16.msra.mxu0 0
      %1010 = vmatprep.subr.bf16.mxu0 0
      %1011 = vmatpush1.bf16.msra.mxu0 0
      %1012 = vmatprep.subr.bf16.mxu0 0
      %1013 = vmatpush1.bf16.msra.mxu0 0
      %1014 = vmatprep.subr.bf16.mxu0 0
      %1015 = vmatpush1.bf16.msra.mxu0 0
      %1016 = vmatprep.subr.bf16.mxu0 0
      %1017 = vmatpush1.bf16.msra.mxu0 0
      %1018 = vmatprep.subr.bf16.mxu0 0
      %1019 = vmatpush1.bf16.msra.mxu0 0
      %1020 = vmatprep.subr.bf16.mxu0 0
      %1021 = vmatpush1.bf16.msra.mxu0 0
      %1022 = vmatprep.subr.bf16.mxu0 0
      %1023 = vmatpush1.bf16.msra.mxu0 0
      %1024 = vmatprep.mubr.bf16.mxu0 0
      %1025 = vmatmul.mubr.bf16.gmra.mrb[0].mxu0 %v990
      %v1026 = vpop.f32.mrb[0].mxu0
      %v1027 = vadd.f32 %v963, %v1026
      %v1028 = vpop.f32.mrb[0].mxu0
      %v1029 = vpop.f32.mrb[0].mxu0
      %v1030 = vpop.f32.mrb[0].mxu0
      %1031 = vdwg.mxu0
      %v1032 = vadd.f32 %v843, %v1027
      %v1033 = vpack.c.bf16 %v1032, %v1032
      %v1034 = vld [vmem:[%s14] sm:$0xf]
      %v1035 = vld [vmem:[%s14 + $0x4] sm:$0xf]
      %v1036 = vld [vmem:[%s14 + $0x8] sm:$0xf]
      %v1037 = vld [vmem:[%s14 + $0xc] sm:$0xf]
      %v1038 = vld [vmem:[%s554] sm:$0x1]
      %v1040 = vlaneseq
      %v1041 = vshrl.u32 %v1040, 7
      %v1042 = vsub.s32 0, %v1041
      %v1043 = vrot.slane %v1038, %v1042
      %v1049 = vunpack.c.l.b16 %v1034
      %v1050 = vunpack.c.l.b16 %v1035
      %v1051 = vunpack.c.l.b16 %v1036
      %v1052 = vunpack.c.l.b16 %v1037
      %v1053 = vpack.c.b16 %v1050, %v1049
      %v1054 = vpack.c.b16 %v1052, %v1051
      %v1058 = vsel %vm654, %v1033, 0
      %1060 = vmatprep.subr.bf16.mxu0 0
      %1061 = vmatpush1.bf16.msra.mxu0 %v1053
      %1062 = vmatprep.subr.bf16.mxu0 0
      %1063 = vmatpush1.bf16.msra.mxu0 %v1054
      %1064 = vmatprep.subr.bf16.mxu0 0
      %1065 = vmatpush1.bf16.msra.mxu0 0
      %1066 = vmatprep.subr.bf16.mxu0 0
      %1067 = vmatpush1.bf16.msra.mxu0 0
      %1068 = vmatprep.subr.bf16.mxu0 0
      %1069 = vmatpush1.bf16.msra.mxu0 0
      %1070 = vmatprep.subr.bf16.mxu0 0
      %1071 = vmatpush1.bf16.msra.mxu0 0
      %1072 = vmatprep.subr.bf16.mxu0 0
      %1073 = vmatpush1.bf16.msra.mxu0 0
      %1074 = vmatprep.subr.bf16.mxu0 0
      %1075 = vmatpush1.bf16.msra.mxu0 0
      %1076 = vmatprep.subr.bf16.mxu0 0
      %1077 = vmatpush1.bf16.msra.mxu0 0
      %1078 = vmatprep.subr.bf16.mxu0 0
      %1079 = vmatpush1.bf16.msra.mxu0 0
      %1080 = vmatprep.subr.bf16.mxu0 0
      %1081 = vmatpush1.bf16.msra.mxu0 0
      %1082 = vmatprep.subr.bf16.mxu0 0
      %1083 = vmatpush1.bf16.msra.mxu0 0
      %1084 = vmatprep.subr.bf16.mxu0 0
      %1085 = vmatpush1.bf16.msra.mxu0 0
      %1086 = vmatprep.subr.bf16.mxu0 0
      %1087 = vmatpush1.bf16.msra.mxu0 0
      %1088 = vmatprep.subr.bf16.mxu0 0
      %1089 = vmatpush1.bf16.msra.mxu0 0
      %1090 = vmatprep.subr.bf16.mxu0 0
      %1091 = vmatpush1.bf16.msra.mxu0 0
      %1092 = vmatprep.mubr.bf16.mxu0 0
      %1093 = vmatmul.mubr.bf16.gmra.mrb[0].mxu0 %v1058
      %v1094 = vpop.f32.mrb[0].mxu0
      %v1095 = vadd.f32 %v1043, %v1094
      %v1096 = vpop.f32.mrb[0].mxu0
      %v1097 = vpop.f32.mrb[0].mxu0
      %v1098 = vpop.f32.mrb[0].mxu0
      %1099 = vdwg.mxu0
      %1100 = vst.msk [vmem:[%s561] sm:$0xff] %vm580, %v1095
      %p1101 = scmp.lt.s32.totalorder %s31, 3
      %s1102 = scalar_select %p1101, %s31, 3
      %p1103 = scmp.lt.s32.totalorder %s32, 0
      %s1104 = scalar_select %p1103, %s32, 0
      %s1105 = sadd.s32 %s1104, %s1102
      %s1106 = smul.addr %s1105, 8
      %s1107 = scalar_lea.vmem %s16, %s1106
      // Predicated region
      $region85: #{mlpmixer_forward.2} parent=83 // pred_check
        %p1108 = pneg %p407
      $region86: #{mlpmixer_forward.2} parent=83 // pred_check_branch
        %1110 = sbr.rel (%p1108) target = $region88
      $region87: #{mlpmixer_forward.2} parent=83 // pred_region
        _
      $region88: #{mlpmixer_forward.2} parent=83 // pred_fallthru
        _
    $region84: #{mlpmixer_forward.2} parent=5 // pred_fallthru
      _
    %p1111 = scmp.le.s32.totalorder 2, %s22
    // Predicated region
    $region89: #{mlpmixer_forward.2} parent=5 // pred_check
      %p1112 = pneg %p1111
    $region90: #{mlpmixer_forward.2} parent=5 // pred_check_branch
      %1114 = sbr.rel (%p1112) target = $region92
    $region91: #{mlpmixer_forward.2} parent=5 // pred_region
      %s1115 = ssub.s32 %s22, 2
      // Predicated region
      $region93: #{mlpmixer_forward.2} parent=91 // pred_check
        %p1116 = pneg %p413
      $region94: #{mlpmixer_forward.2} parent=91 // pred_check_branch
        %1118 = sbr.rel (%p1116) target = $region96
      $region95: #{mlpmixer_forward.2} parent=91 // pred_region
        %p1119 = scmp.lt.s32.totalorder %s33, 3
        %s1120 = scalar_select %p1119, %s33, 3
        %p1121 = scmp.lt.s32.totalorder %s34, 0
        %s1122 = scalar_select %p1121, %s34, 0
        %s1123 = sadd.s32 %s1122, %s1120
        %s1124 = smul.addr %s1123, 8
        %s1125 = scalar_lea.vmem %s16, %s1124
      $region96: #{mlpmixer_forward.2} parent=91 // pred_fallthru
        _
    $region92: #{mlpmixer_forward.2} parent=5 // pred_fallthru
      _
  $region6: #{mlpmixer_forward.2} parent=0 // loop_footer
    %s26 = sadd.s32 1, %s22
  $region7: #{mlpmixer_forward.2} parent=0 // loop_footer_branch
    %21 = sbr.rel target = $region3
  $region8: #{mlpmixer_forward.2} parent=0 // loop_exit
    _

</llo_original>
